<compile_context>
chip_gen: v7x
topology: tpu7x:2x2x1
jax: 0.10.0
libtpu: 0.0.40
codegen_flags: <defaults>
</compile_context>

<pallas_src>
import functools

import jax
import jax.numpy as jnp
from jax.experimental import pallas as pl
from jax.experimental.pallas import tpu as pltpu

LN_EPS = 1e-5  # PyTorch nn.LayerNorm default


def _layernorm(x, g, b):
    # Fused statistics: mean and mean-of-squares are independent reductions.
    mu = jnp.mean(x, axis=-1, keepdims=True)
    ms = jnp.mean(x * x, axis=-1, keepdims=True)
    var = ms - mu * mu
    return (x - mu) * jax.lax.rsqrt(var + LN_EPS) * g + b


def tft_encoder_kernel(
    TB, S, n_heads, d_ff,
    # refs (one grid step covers TB whole sequences)
    x_ref,      # (TB*S, D)          f32
    wbig_ref,   # (D, 7D + d_ff)     bf16   wq|wk|wv|wo|fc1_w|fc2_w|gw|w1
    w2_ref,     # (d_ff, D)          bf16
    vec_ref,    # (12 + d_ff/D, D)   f32    biases / LN params (see wrapper)
    out_ref,    # (TB*S, D)          f32
):
    x = x_ref[...]                          # (N, D) f32
    N, D = x.shape
    hd = D // n_heads
    scale = 1.0 / (hd ** 0.5)

    wbig = wbig_ref[...]                    # bf16
    w2 = w2_ref[...]                        # bf16
    vecs = vec_ref[...]                     # f32

    # vector-slab rows
    bo, ln1_g, ln1_b = vecs[0:1], vecs[1:2], vecs[2:3]
    b2, ln2_g, ln2_b = vecs[3:4], vecs[4:5], vecs[5:6]
    fc1_b, fc2_b, gb = vecs[6:7], vecs[7:8], vecs[8:9]
    bq, bk, bv = vecs[9:10], vecs[10:11], vecs[11:12]
    n_b1 = d_ff // D
    b1 = jnp.concatenate([vecs[12 + j:13 + j] for j in range(n_b1)], axis=-1)  # (1, d_ff)

    # weight-slab columns
    wo = wbig[:, 3 * D:4 * D]
    fc1_w = wbig[:, 4 * D:5 * D]
    fc2_w = wbig[:, 5 * D:6 * D]
    gw = wbig[:, 6 * D:7 * D]
    w1 = wbig[:, 7 * D:7 * D + d_ff]

    # ---- MultiHeadAttention (self-attention, q=k=v=x, mask=None) ------------
    x_bf = x.astype(jnp.bfloat16)
    qkv = jnp.dot(x_bf, wbig[:, 0:3 * D],
                  preferred_element_type=jnp.float32)        # (N, 3D) f32, no bias yet
    qkv3 = qkv.reshape(TB, S, 3 * D)                         # leading-dim split only

    attn = jnp.zeros((N, D), jnp.float32)
    for h in range(n_heads):                                 # static, small head count
        lo, hi = h * hd, (h + 1) * hd
        qh = qkv3[:, :, lo:hi] + bq[:, lo:hi]                # (TB, S, hd) f32
        kh = qkv3[:, :, D + lo:D + hi] + bk[:, lo:hi]
        vh = qkv3[:, :, 2 * D + lo:2 * D + hi] + bv[:, lo:hi]

        s = jnp.einsum("bqd,bkd->bqk",
                       qh.astype(jnp.bfloat16), kh.astype(jnp.bfloat16),
                       preferred_element_type=jnp.float32) * scale
        s = s - jnp.max(s, axis=-1, keepdims=True)
        p = jnp.exp(s)
        denom = jnp.sum(p, axis=-1, keepdims=True)
        r = pl.reciprocal(denom, approx=True)
        r = r * (2.0 - denom * r)                            # one Newton step -> near-exact
        p = p * r

        ctx_h = jnp.einsum("bqk,bkd->bqd",
                           p.astype(jnp.bfloat16), vh.astype(jnp.bfloat16),
                           preferred_element_type=jnp.float32)   # (TB, S, hd)
        # Fold the output projection into the head loop (no lane-axis concat):
        attn = attn + jnp.dot(ctx_h.reshape(N, hd).astype(jnp.bfloat16),
                              wo[lo:hi, :],
                              preferred_element_type=jnp.float32)

    attn_out = attn + bo
    # dropout -> identity (eval mode)
    x1 = _layernorm(x + attn_out, ln1_g, ln1_b)

    # ---- SimpleFeedForward ---------------------------------------------------
    h1 = jnp.dot(x1.astype(jnp.bfloat16), w1,
                 preferred_element_type=jnp.float32) + b1
    h1 = jnp.maximum(h1, 0.0)                                # ReLU
    ff = jnp.dot(h1.astype(jnp.bfloat16), w2,
                 preferred_element_type=jnp.float32) + b2
    x2 = _layernorm(x1 + ff, ln2_g, ln2_b)

    # ---- GatedResidualNetwork (input_size == output_size -> no skip_proj) ---
    hid = jnp.dot(x2.astype(jnp.bfloat16), fc1_w,
                  preferred_element_type=jnp.float32) + fc1_b
    # ELU(alpha=1); clamp exp input so the unselected branch never overflows.
    hid = jnp.where(hid > 0.0, hid, jnp.exp(jnp.minimum(hid, 0.0)) - 1.0)
    hid = jnp.dot(hid.astype(jnp.bfloat16), fc2_w,
                  preferred_element_type=jnp.float32) + fc2_b
    gate = jax.nn.sigmoid(
        jnp.dot(hid.astype(jnp.bfloat16), gw,
                preferred_element_type=jnp.float32) + gb)
    out_ref[...] = (hid * gate + (1.0 - gate) * x2).astype(out_ref.dtype)


def tft_encoder_layer(x, params, n_heads=4):
    B, S, D = x.shape
    d_ff = params["w1"].shape[1]
    assert d_ff % D == 0, "vector-slab packing assumes d_ff is a multiple of d_model"

    # ---- pack into 3 parameter slabs (fewer DMA streams) --------------------
    w_big = jnp.concatenate(
        [params["wq"], params["wk"], params["wv"],
         params["wo"], params["fc1_w"], params["fc2_w"], params["gw"],
         params["w1"]], axis=1).astype(jnp.bfloat16)            # (D, 7D + d_ff)
    w2 = params["w2"].astype(jnp.bfloat16)                      # (d_ff, D)
    vec_pack = jnp.concatenate(
        [params["bo"], params["ln1_g"], params["ln1_b"],
         params["b2"], params["ln2_g"], params["ln2_b"],
         params["fc1_b"], params["fc2_b"], params["gb"],
         params["bq"], params["bk"], params["bv"],
         params["b1"].reshape(d_ff // D, D)], axis=0).astype(jnp.float32)

    N = B * S
    x2d = x.reshape(N, D).astype(jnp.float32)

    # Batch tile = whole sequences, so attention never crosses a block.
    # At the demo size (N=16) this collapses to a single grid step; for
    # production-sized B it tiles the batch (parallel -> both v7x TCs).
    TB = B
    MAX_ROWS = 1024
    if B * S > MAX_ROWS:
        TB = 1
        for cand in range(B, 0, -1):
            if B % cand == 0 and cand * S <= MAX_ROWS:
                TB = cand
                break
    if TB != B and (TB * S) % 8 != 0:       # keep (8,128) sublane rule when tiled
        TB = B
    grid = (B // TB,)

    in_specs = [
        pl.BlockSpec((TB * S, D), lambda i: (i, 0)),      # activations: tiled over batch
        pl.BlockSpec(w_big.shape, lambda i: (0, 0)),      # weights: resident
        pl.BlockSpec(w2.shape, lambda i: (0, 0)),
        pl.BlockSpec(vec_pack.shape, lambda i: (0, 0)),
    ]
    out_specs = pl.BlockSpec((TB * S, D), lambda i: (i, 0))

    out = pl.pallas_call(
        functools.partial(tft_encoder_kernel, TB, S, n_heads, d_ff),
        out_shape=jax.ShapeDtypeStruct((N, D), jnp.float32),
        grid=grid,
        in_specs=in_specs,
        out_specs=out_specs,
        compiler_params=pltpu.CompilerParams(
            dimension_semantics=("parallel",),
            # TODO(synk): re-derive for v7x (64 MiB physical) if D/d_ff/B*S scale up.
            vmem_limit_bytes=32 * 1024 * 1024,
        ),
    )(x2d, w_big, w2, vec_pack)
    return out.reshape(B, S, D)


# ---------------- pure-JAX reference (for correctness check) ----------------
def ref_forward(x, p, n_heads):
    B, S, D = x.shape
    hd = D // n_heads

    def ln(v, g, b):
        mu = jnp.mean(v, axis=-1, keepdims=True)
        var = jnp.mean((v - mu) ** 2, axis=-1, keepdims=True)
        return (v - mu) / jnp.sqrt(var + LN_EPS) * g + b

    q = x @ p["wq"] + p["bq"]
    k = x @ p["wk"] + p["bk"]
    v = x @ p["wv"] + p["bv"]
    qh = q.reshape(B, S, n_heads, hd).transpose(0, 2, 1, 3)
    kh = k.reshape(B, S, n_heads, hd).transpose(0, 2, 1, 3)
    vh = v.reshape(B, S, n_heads, hd).transpose(0, 2, 1, 3)
    s = jnp.einsum("bhqd,bhkd->bhqk", qh, kh) / jnp.sqrt(float(hd))
    a = jax.nn.softmax(s, axis=-1)
    ctx = jnp.einsum("bhqk,bhkd->bhqd", a, vh).transpose(0, 2, 1, 3).reshape(B, S, D)
    attn_out = ctx @ p["wo"] + p["bo"]
    x1 = ln(x + attn_out, p["ln1_g"], p["ln1_b"])

    h1 = jax.nn.relu(x1 @ p["w1"] + p["b1"])
    ff = h1 @ p["w2"] + p["b2"]
    x2 = ln(x1 + ff, p["ln2_g"], p["ln2_b"])

    hid = x2 @ p["fc1_w"] + p["fc1_b"]
    hid = jnp.where(hid > 0.0, hid, jnp.exp(hid) - 1.0)
    hid = hid @ p["fc2_w"] + p["fc2_b"]
    gate = jax.nn.sigmoid(hid @ p["gw"] + p["gb"])
    return hid * gate + (1.0 - gate) * x2


def init_params(key, d_model, d_ff):
    ks = jax.random.split(key, 24)
    r = lambda k, shape: (jax.random.normal(k, shape, jnp.float32) * 0.1)
    p = {
        # MHA: in_proj split into q/k/v, already transposed to (in, out)
        "wq": r(ks[0], (d_model, d_model)),
        "wk": r(ks[1], (d_model, d_model)),
        "wv": r(ks[2], (d_model, d_model)),
        "bq": r(ks[3], (1, d_model)),
        "bk": r(ks[4], (1, d_model)),
        "bv": r(ks[5], (1, d_model)),
        "wo": r(ks[6], (d_model, d_model)),
        "bo": r(ks[7], (1, d_model)),
        "ln1_g": 1.0 + r(ks[8], (1, d_model)),
        "ln1_b": r(ks[9], (1, d_model)),
        # SimpleFeedForward
        "w1": r(ks[10], (d_model, d_ff)),
        "b1": r(ks[11], (1, d_ff)),
        "w2": r(ks[12], (d_ff, d_model)),
        "b2": r(ks[13], (1, d_model)),
        "ln2_g": 1.0 + r(ks[14], (1, d_model)),
        "ln2_b": r(ks[15], (1, d_model)),
        # GRN (input_size == output_size == d_model -> no skip projection)
        "fc1_w": r(ks[16], (d_model, d_model)),
        "fc1_b": r(ks[17], (1, d_model)),
        "fc2_w": r(ks[18], (d_model, d_model)),
        "fc2_b": r(ks[19], (1, d_model)),
        "gw": r(ks[20], (d_model, d_model)),
        "gb": r(ks[21], (1, d_model)),
    }
    return p


if __name__ == "__main__":
    B, S, D = 2, 8, 32
    N_HEADS, D_FF = 4, 64

    key = jax.random.PRNGKey(0)
    kx, kp = jax.random.split(key)
    x = jax.random.normal(kx, (B, S, D), jnp.float32)
    params = init_params(kp, D, D_FF)

    out = tft_encoder_layer(x, params, n_heads=N_HEADS)
    out = jax.block_until_ready(out)

    ref = ref_forward(x, params, N_HEADS)
    assert out.shape == (B, S, D)
    # Tolerance reflects bf16 MXU inputs (weights + matmul operands); all
    # elementwise math is f32 and the softmax reciprocal is Newton-refined.
    err = jnp.max(jnp.abs(out - ref))
    assert jnp.allclose(out, ref, atol=5e-2, rtol=5e-2), f"max abs err = {err}"
    print("KERNEL_OK")
</pallas_src>

<mosaic_0001>
module attributes {stable_mosaic.version = 11 : i64} {
  func.func @tft_encoder_kernel(%arg0: i32, %arg1: memref<16x32xf32, #tpu.memory_space<vmem>>, %arg2: memref<32x288xbf16, #tpu.memory_space<vmem>>, %arg3: memref<64x32xbf16, #tpu.memory_space<vmem>>, %arg4: memref<14x32xf32, #tpu.memory_space<vmem>>, %arg5: memref<16x32xf32, #tpu.memory_space<vmem>>) attributes {dimension_semantics = [#tpu.dimension_semantics<parallel>], iteration_bounds = array<i64: 1>, scalar_prefetch = 0 : i64, scratch_operands = 0 : i64, tpu.core_type = #tpu.core_type<tc>, window_params = [{transform_indices = @transform_0, window_bounds = array<i64: 16, 32>}, {pipeline_mode = #tpu.pipeline_mode<synchronous>, transform_indices = @transform_1, window_bounds = array<i64: 32, 288>}, {pipeline_mode = #tpu.pipeline_mode<synchronous>, transform_indices = @transform_2, window_bounds = array<i64: 64, 32>}, {pipeline_mode = #tpu.pipeline_mode<synchronous>, transform_indices = @transform_3, window_bounds = array<i64: 14, 32>}, {transform_indices = @transform_4, window_bounds = array<i64: 16, 32>}]} {
    %c0 = arith.constant 0 : index
    %c0_0 = arith.constant 0 : index
    %0 = vector.load %arg1[%c0, %c0_0] : memref<16x32xf32, #tpu.memory_space<vmem>>, vector<16x32xf32>
    %c0_1 = arith.constant 0 : index
    %c0_2 = arith.constant 0 : index
    %1 = vector.load %arg2[%c0_1, %c0_2] : memref<32x288xbf16, #tpu.memory_space<vmem>>, vector<32x288xbf16>
    %c0_3 = arith.constant 0 : index
    %c0_4 = arith.constant 0 : index
    %2 = vector.load %arg3[%c0_3, %c0_4] : memref<64x32xbf16, #tpu.memory_space<vmem>>, vector<64x32xbf16>
    %c0_5 = arith.constant 0 : index
    %c0_6 = arith.constant 0 : index
    %3 = vector.load %arg4[%c0_5, %c0_6] : memref<14x32xf32, #tpu.memory_space<vmem>>, vector<14x32xf32>
    %4 = vector.extract_strided_slice %3 {offsets = [0, 0], sizes = [1, 32], strides = [1, 1]} : vector<14x32xf32> to vector<1x32xf32>
    %5 = vector.extract_strided_slice %3 {offsets = [1, 0], sizes = [1, 32], strides = [1, 1]} : vector<14x32xf32> to vector<1x32xf32>
    %6 = vector.extract_strided_slice %3 {offsets = [2, 0], sizes = [1, 32], strides = [1, 1]} : vector<14x32xf32> to vector<1x32xf32>
    %7 = vector.extract_strided_slice %3 {offsets = [3, 0], sizes = [1, 32], strides = [1, 1]} : vector<14x32xf32> to vector<1x32xf32>
    %8 = vector.extract_strided_slice %3 {offsets = [4, 0], sizes = [1, 32], strides = [1, 1]} : vector<14x32xf32> to vector<1x32xf32>
    %9 = vector.extract_strided_slice %3 {offsets = [5, 0], sizes = [1, 32], strides = [1, 1]} : vector<14x32xf32> to vector<1x32xf32>
    %10 = vector.extract_strided_slice %3 {offsets = [6, 0], sizes = [1, 32], strides = [1, 1]} : vector<14x32xf32> to vector<1x32xf32>
    %11 = vector.extract_strided_slice %3 {offsets = [7, 0], sizes = [1, 32], strides = [1, 1]} : vector<14x32xf32> to vector<1x32xf32>
    %12 = vector.extract_strided_slice %3 {offsets = [8, 0], sizes = [1, 32], strides = [1, 1]} : vector<14x32xf32> to vector<1x32xf32>
    %13 = vector.extract_strided_slice %3 {offsets = [9, 0], sizes = [1, 32], strides = [1, 1]} : vector<14x32xf32> to vector<1x32xf32>
    %14 = vector.extract_strided_slice %3 {offsets = [10, 0], sizes = [1, 32], strides = [1, 1]} : vector<14x32xf32> to vector<1x32xf32>
    %15 = vector.extract_strided_slice %3 {offsets = [11, 0], sizes = [1, 32], strides = [1, 1]} : vector<14x32xf32> to vector<1x32xf32>
    %16 = vector.extract_strided_slice %3 {offsets = [12, 0], sizes = [1, 32], strides = [1, 1]} : vector<14x32xf32> to vector<1x32xf32>
    %17 = vector.extract_strided_slice %3 {offsets = [13, 0], sizes = [1, 32], strides = [1, 1]} : vector<14x32xf32> to vector<1x32xf32>
    %18 = tpu.concatenate %16, %17 in 1 : vector<1x32xf32>, vector<1x32xf32> -> vector<1x64xf32>
    %19 = vector.extract_strided_slice %1 {offsets = [0, 96], sizes = [32, 32], strides = [1, 1]} : vector<32x288xbf16> to vector<32x32xbf16>
    %20 = vector.extract_strided_slice %1 {offsets = [0, 128], sizes = [32, 32], strides = [1, 1]} : vector<32x288xbf16> to vector<32x32xbf16>
    %21 = vector.extract_strided_slice %1 {offsets = [0, 160], sizes = [32, 32], strides = [1, 1]} : vector<32x288xbf16> to vector<32x32xbf16>
    %22 = vector.extract_strided_slice %1 {offsets = [0, 192], sizes = [32, 32], strides = [1, 1]} : vector<32x288xbf16> to vector<32x32xbf16>
    %23 = vector.extract_strided_slice %1 {offsets = [0, 224], sizes = [32, 64], strides = [1, 1]} : vector<32x288xbf16> to vector<32x64xbf16>
    %24 = arith.truncf %0 : vector<16x32xf32> to vector<16x32xbf16>
    %25 = vector.extract_strided_slice %1 {offsets = [0, 0], sizes = [32, 96], strides = [1, 1]} : vector<32x288xbf16> to vector<32x96xbf16>
    %cst = arith.constant dense<0.000000e+00> : vector<16x96xf32>
    %26 = tpu.matmul %24, %25, %cst {dimension_numbers = #tpu.dot_dimension_numbers<[1], [0], [0], [1], [0, 0, 1, 1], [], []>} : vector<16x32xbf16>, vector<32x96xbf16>, vector<16x96xf32> -> vector<16x96xf32>
    %27 = vector.shape_cast %26 : vector<16x96xf32> to vector<2x8x96xf32>
    %cst_7 = arith.constant 0.000000e+00 : f32
    %28 = vector.broadcast %cst_7 : f32 to vector<16x32xf32>
    %29 = vector.extract_strided_slice %27 {offsets = [0, 0, 0], sizes = [2, 8, 8], strides = [1, 1, 1]} : vector<2x8x96xf32> to vector<2x8x8xf32>
    %30 = vector.extract_strided_slice %13 {offsets = [0, 0], sizes = [1, 8], strides = [1, 1]} : vector<1x32xf32> to vector<1x8xf32>
    %31 = vector.shape_cast %30 : vector<1x8xf32> to vector<1x1x8xf32>
    %32 = vector.broadcast %31 : vector<1x1x8xf32> to vector<2x8x8xf32>
    %33 = arith.addf %29, %32 : vector<2x8x8xf32>
    %34 = vector.extract_strided_slice %27 {offsets = [0, 0, 32], sizes = [2, 8, 8], strides = [1, 1, 1]} : vector<2x8x96xf32> to vector<2x8x8xf32>
    %35 = vector.extract_strided_slice %14 {offsets = [0, 0], sizes = [1, 8], strides = [1, 1]} : vector<1x32xf32> to vector<1x8xf32>
    %36 = vector.shape_cast %35 : vector<1x8xf32> to vector<1x1x8xf32>
    %37 = vector.broadcast %36 : vector<1x1x8xf32> to vector<2x8x8xf32>
    %38 = arith.addf %34, %37 : vector<2x8x8xf32>
    %39 = vector.extract_strided_slice %27 {offsets = [0, 0, 64], sizes = [2, 8, 8], strides = [1, 1, 1]} : vector<2x8x96xf32> to vector<2x8x8xf32>
    %40 = vector.extract_strided_slice %15 {offsets = [0, 0], sizes = [1, 8], strides = [1, 1]} : vector<1x32xf32> to vector<1x8xf32>
    %41 = vector.shape_cast %40 : vector<1x8xf32> to vector<1x1x8xf32>
    %42 = vector.broadcast %41 : vector<1x1x8xf32> to vector<2x8x8xf32>
    %43 = arith.addf %39, %42 : vector<2x8x8xf32>
    %44 = arith.truncf %33 : vector<2x8x8xf32> to vector<2x8x8xbf16>
    %45 = arith.truncf %38 : vector<2x8x8xf32> to vector<2x8x8xbf16>
    "tpu.trace_start"() <{level = 10 : i32, message = "bqd,bkd->bqk"}> : () -> ()
    %cst_8 = arith.constant dense<0.000000e+00> : vector<2x8x8xf32>
    %46 = tpu.matmul %44, %45, %cst_8 {dimension_numbers = #tpu.dot_dimension_numbers<[2], [2], [1], [1], [0, 0, 0, 1, 1, 1], [0], [0]>} : vector<2x8x8xbf16>, vector<2x8x8xbf16>, vector<2x8x8xf32> -> vector<2x8x8xf32>
    "tpu.trace_stop"() : () -> ()
    %cst_9 = arith.constant 0.353553385 : f32
    %47 = vector.broadcast %cst_9 : f32 to vector<2x8x8xf32>
    %48 = arith.mulf %46, %47 : vector<2x8x8xf32>
    %cst_10 = arith.constant dense<0xFF800000> : vector<2x8xf32>
    %49 = vector.multi_reduction <maximumf>, %48, %cst_10 [2] : vector<2x8x8xf32> to vector<2x8xf32>
    %50 = vector.shape_cast %49 : vector<2x8xf32> to vector<2x8x1xf32>
    %51 = vector.broadcast %50 : vector<2x8x1xf32> to vector<2x8x8xf32>
    %52 = arith.subf %48, %51 : vector<2x8x8xf32>
    %53 = math.exp %52 : vector<2x8x8xf32>
    %cst_11 = arith.constant dense<0.000000e+00> : vector<2x8xf32>
    %54 = vector.multi_reduction <add>, %53, %cst_11 [2] : vector<2x8x8xf32> to vector<2x8xf32>
    %55 = vector.shape_cast %54 : vector<2x8xf32> to vector<2x8x1xf32>
    %56 = tpu.reciprocal %55 {approx = true} : vector<2x8x1xf32> -> vector<2x8x1xf32>
    %57 = arith.mulf %55, %56 : vector<2x8x1xf32>
    %cst_12 = arith.constant 2.000000e+00 : f32
    %58 = vector.broadcast %cst_12 : f32 to vector<2x8x1xf32>
    %59 = arith.subf %58, %57 : vector<2x8x1xf32>
    %60 = arith.mulf %56, %59 : vector<2x8x1xf32>
    %61 = vector.broadcast %60 : vector<2x8x1xf32> to vector<2x8x8xf32>
    %62 = arith.mulf %53, %61 : vector<2x8x8xf32>
    %63 = arith.truncf %62 : vector<2x8x8xf32> to vector<2x8x8xbf16>
    %64 = arith.truncf %43 : vector<2x8x8xf32> to vector<2x8x8xbf16>
    "tpu.trace_start"() <{level = 10 : i32, message = "bqk,bkd->bqd"}> : () -> ()
    %cst_13 = arith.constant dense<0.000000e+00> : vector<2x8x8xf32>
    %65 = tpu.matmul %63, %64, %cst_13 {dimension_numbers = #tpu.dot_dimension_numbers<[2], [1], [1], [2], [0, 0, 0, 1, 1, 2], [0], [0]>} : vector<2x8x8xbf16>, vector<2x8x8xbf16>, vector<2x8x8xf32> -> vector<2x8x8xf32>
    "tpu.trace_stop"() : () -> ()
    %66 = vector.shape_cast %65 : vector<2x8x8xf32> to vector<16x8xf32>
    %67 = arith.truncf %66 : vector<16x8xf32> to vector<16x8xbf16>
    %68 = vector.extract_strided_slice %19 {offsets = [0, 0], sizes = [8, 32], strides = [1, 1]} : vector<32x32xbf16> to vector<8x32xbf16>
    %cst_14 = arith.constant dense<0.000000e+00> : vector<16x32xf32>
    %69 = tpu.matmul %67, %68, %cst_14 {dimension_numbers = #tpu.dot_dimension_numbers<[1], [0], [0], [1], [0, 0, 1, 1], [], []>} : vector<16x8xbf16>, vector<8x32xbf16>, vector<16x32xf32> -> vector<16x32xf32>
    %70 = arith.addf %28, %69 : vector<16x32xf32>
    %71 = vector.extract_strided_slice %27 {offsets = [0, 0, 8], sizes = [2, 8, 8], strides = [1, 1, 1]} : vector<2x8x96xf32> to vector<2x8x8xf32>
    %72 = vector.extract_strided_slice %13 {offsets = [0, 8], sizes = [1, 8], strides = [1, 1]} : vector<1x32xf32> to vector<1x8xf32>
    %73 = vector.shape_cast %72 : vector<1x8xf32> to vector<1x1x8xf32>
    %74 = vector.broadcast %73 : vector<1x1x8xf32> to vector<2x8x8xf32>
    %75 = arith.addf %71, %74 : vector<2x8x8xf32>
    %76 = vector.extract_strided_slice %27 {offsets = [0, 0, 40], sizes = [2, 8, 8], strides = [1, 1, 1]} : vector<2x8x96xf32> to vector<2x8x8xf32>
    %77 = vector.extract_strided_slice %14 {offsets = [0, 8], sizes = [1, 8], strides = [1, 1]} : vector<1x32xf32> to vector<1x8xf32>
    %78 = vector.shape_cast %77 : vector<1x8xf32> to vector<1x1x8xf32>
    %79 = vector.broadcast %78 : vector<1x1x8xf32> to vector<2x8x8xf32>
    %80 = arith.addf %76, %79 : vector<2x8x8xf32>
    %81 = vector.extract_strided_slice %27 {offsets = [0, 0, 72], sizes = [2, 8, 8], strides = [1, 1, 1]} : vector<2x8x96xf32> to vector<2x8x8xf32>
    %82 = vector.extract_strided_slice %15 {offsets = [0, 8], sizes = [1, 8], strides = [1, 1]} : vector<1x32xf32> to vector<1x8xf32>
    %83 = vector.shape_cast %82 : vector<1x8xf32> to vector<1x1x8xf32>
    %84 = vector.broadcast %83 : vector<1x1x8xf32> to vector<2x8x8xf32>
    %85 = arith.addf %81, %84 : vector<2x8x8xf32>
    %86 = arith.truncf %75 : vector<2x8x8xf32> to vector<2x8x8xbf16>
    %87 = arith.truncf %80 : vector<2x8x8xf32> to vector<2x8x8xbf16>
    "tpu.trace_start"() <{level = 10 : i32, message = "bqd,bkd->bqk"}> : () -> ()
    %cst_15 = arith.constant dense<0.000000e+00> : vector<2x8x8xf32>
    %88 = tpu.matmul %86, %87, %cst_15 {dimension_numbers = #tpu.dot_dimension_numbers<[2], [2], [1], [1], [0, 0, 0, 1, 1, 1], [0], [0]>} : vector<2x8x8xbf16>, vector<2x8x8xbf16>, vector<2x8x8xf32> -> vector<2x8x8xf32>
    "tpu.trace_stop"() : () -> ()
    %cst_16 = arith.constant 0.353553385 : f32
    %89 = vector.broadcast %cst_16 : f32 to vector<2x8x8xf32>
    %90 = arith.mulf %88, %89 : vector<2x8x8xf32>
    %cst_17 = arith.constant dense<0xFF800000> : vector<2x8xf32>
    %91 = vector.multi_reduction <maximumf>, %90, %cst_17 [2] : vector<2x8x8xf32> to vector<2x8xf32>
    %92 = vector.shape_cast %91 : vector<2x8xf32> to vector<2x8x1xf32>
    %93 = vector.broadcast %92 : vector<2x8x1xf32> to vector<2x8x8xf32>
    %94 = arith.subf %90, %93 : vector<2x8x8xf32>
    %95 = math.exp %94 : vector<2x8x8xf32>
    %cst_18 = arith.constant dense<0.000000e+00> : vector<2x8xf32>
    %96 = vector.multi_reduction <add>, %95, %cst_18 [2] : vector<2x8x8xf32> to vector<2x8xf32>
    %97 = vector.shape_cast %96 : vector<2x8xf32> to vector<2x8x1xf32>
    %98 = tpu.reciprocal %97 {approx = true} : vector<2x8x1xf32> -> vector<2x8x1xf32>
    %99 = arith.mulf %97, %98 : vector<2x8x1xf32>
    %cst_19 = arith.constant 2.000000e+00 : f32
    %100 = vector.broadcast %cst_19 : f32 to vector<2x8x1xf32>
    %101 = arith.subf %100, %99 : vector<2x8x1xf32>
    %102 = arith.mulf %98, %101 : vector<2x8x1xf32>
    %103 = vector.broadcast %102 : vector<2x8x1xf32> to vector<2x8x8xf32>
    %104 = arith.mulf %95, %103 : vector<2x8x8xf32>
    %105 = arith.truncf %104 : vector<2x8x8xf32> to vector<2x8x8xbf16>
    %106 = arith.truncf %85 : vector<2x8x8xf32> to vector<2x8x8xbf16>
    "tpu.trace_start"() <{level = 10 : i32, message = "bqk,bkd->bqd"}> : () -> ()
    %cst_20 = arith.constant dense<0.000000e+00> : vector<2x8x8xf32>
    %107 = tpu.matmul %105, %106, %cst_20 {dimension_numbers = #tpu.dot_dimension_numbers<[2], [1], [1], [2], [0, 0, 0, 1, 1, 2], [0], [0]>} : vector<2x8x8xbf16>, vector<2x8x8xbf16>, vector<2x8x8xf32> -> vector<2x8x8xf32>
    "tpu.trace_stop"() : () -> ()
    %108 = vector.shape_cast %107 : vector<2x8x8xf32> to vector<16x8xf32>
    %109 = arith.truncf %108 : vector<16x8xf32> to vector<16x8xbf16>
    %110 = vector.extract_strided_slice %19 {offsets = [8, 0], sizes = [8, 32], strides = [1, 1]} : vector<32x32xbf16> to vector<8x32xbf16>
    %cst_21 = arith.constant dense<0.000000e+00> : vector<16x32xf32>
    %111 = tpu.matmul %109, %110, %cst_21 {dimension_numbers = #tpu.dot_dimension_numbers<[1], [0], [0], [1], [0, 0, 1, 1], [], []>} : vector<16x8xbf16>, vector<8x32xbf16>, vector<16x32xf32> -> vector<16x32xf32>
    %112 = arith.addf %70, %111 : vector<16x32xf32>
    %113 = vector.extract_strided_slice %27 {offsets = [0, 0, 16], sizes = [2, 8, 8], strides = [1, 1, 1]} : vector<2x8x96xf32> to vector<2x8x8xf32>
    %114 = vector.extract_strided_slice %13 {offsets = [0, 16], sizes = [1, 8], strides = [1, 1]} : vector<1x32xf32> to vector<1x8xf32>
    %115 = vector.shape_cast %114 : vector<1x8xf32> to vector<1x1x8xf32>
    %116 = vector.broadcast %115 : vector<1x1x8xf32> to vector<2x8x8xf32>
    %117 = arith.addf %113, %116 : vector<2x8x8xf32>
    %118 = vector.extract_strided_slice %27 {offsets = [0, 0, 48], sizes = [2, 8, 8], strides = [1, 1, 1]} : vector<2x8x96xf32> to vector<2x8x8xf32>
    %119 = vector.extract_strided_slice %14 {offsets = [0, 16], sizes = [1, 8], strides = [1, 1]} : vector<1x32xf32> to vector<1x8xf32>
    %120 = vector.shape_cast %119 : vector<1x8xf32> to vector<1x1x8xf32>
    %121 = vector.broadcast %120 : vector<1x1x8xf32> to vector<2x8x8xf32>
    %122 = arith.addf %118, %121 : vector<2x8x8xf32>
    %123 = vector.extract_strided_slice %27 {offsets = [0, 0, 80], sizes = [2, 8, 8], strides = [1, 1, 1]} : vector<2x8x96xf32> to vector<2x8x8xf32>
    %124 = vector.extract_strided_slice %15 {offsets = [0, 16], sizes = [1, 8], strides = [1, 1]} : vector<1x32xf32> to vector<1x8xf32>
    %125 = vector.shape_cast %124 : vector<1x8xf32> to vector<1x1x8xf32>
    %126 = vector.broadcast %125 : vector<1x1x8xf32> to vector<2x8x8xf32>
    %127 = arith.addf %123, %126 : vector<2x8x8xf32>
    %128 = arith.truncf %117 : vector<2x8x8xf32> to vector<2x8x8xbf16>
    %129 = arith.truncf %122 : vector<2x8x8xf32> to vector<2x8x8xbf16>
    "tpu.trace_start"() <{level = 10 : i32, message = "bqd,bkd->bqk"}> : () -> ()
    %cst_22 = arith.constant dense<0.000000e+00> : vector<2x8x8xf32>
    %130 = tpu.matmul %128, %129, %cst_22 {dimension_numbers = #tpu.dot_dimension_numbers<[2], [2], [1], [1], [0, 0, 0, 1, 1, 1], [0], [0]>} : vector<2x8x8xbf16>, vector<2x8x8xbf16>, vector<2x8x8xf32> -> vector<2x8x8xf32>
    "tpu.trace_stop"() : () -> ()
    %cst_23 = arith.constant 0.353553385 : f32
    %131 = vector.broadcast %cst_23 : f32 to vector<2x8x8xf32>
    %132 = arith.mulf %130, %131 : vector<2x8x8xf32>
    %cst_24 = arith.constant dense<0xFF800000> : vector<2x8xf32>
    %133 = vector.multi_reduction <maximumf>, %132, %cst_24 [2] : vector<2x8x8xf32> to vector<2x8xf32>
    %134 = vector.shape_cast %133 : vector<2x8xf32> to vector<2x8x1xf32>
    %135 = vector.broadcast %134 : vector<2x8x1xf32> to vector<2x8x8xf32>
    %136 = arith.subf %132, %135 : vector<2x8x8xf32>
    %137 = math.exp %136 : vector<2x8x8xf32>
    %cst_25 = arith.constant dense<0.000000e+00> : vector<2x8xf32>
    %138 = vector.multi_reduction <add>, %137, %cst_25 [2] : vector<2x8x8xf32> to vector<2x8xf32>
    %139 = vector.shape_cast %138 : vector<2x8xf32> to vector<2x8x1xf32>
    %140 = tpu.reciprocal %139 {approx = true} : vector<2x8x1xf32> -> vector<2x8x1xf32>
    %141 = arith.mulf %139, %140 : vector<2x8x1xf32>
    %cst_26 = arith.constant 2.000000e+00 : f32
    %142 = vector.broadcast %cst_26 : f32 to vector<2x8x1xf32>
    %143 = arith.subf %142, %141 : vector<2x8x1xf32>
    %144 = arith.mulf %140, %143 : vector<2x8x1xf32>
    %145 = vector.broadcast %144 : vector<2x8x1xf32> to vector<2x8x8xf32>
    %146 = arith.mulf %137, %145 : vector<2x8x8xf32>
    %147 = arith.truncf %146 : vector<2x8x8xf32> to vector<2x8x8xbf16>
    %148 = arith.truncf %127 : vector<2x8x8xf32> to vector<2x8x8xbf16>
    "tpu.trace_start"() <{level = 10 : i32, message = "bqk,bkd->bqd"}> : () -> ()
    %cst_27 = arith.constant dense<0.000000e+00> : vector<2x8x8xf32>
    %149 = tpu.matmul %147, %148, %cst_27 {dimension_numbers = #tpu.dot_dimension_numbers<[2], [1], [1], [2], [0, 0, 0, 1, 1, 2], [0], [0]>} : vector<2x8x8xbf16>, vector<2x8x8xbf16>, vector<2x8x8xf32> -> vector<2x8x8xf32>
    "tpu.trace_stop"() : () -> ()
    %150 = vector.shape_cast %149 : vector<2x8x8xf32> to vector<16x8xf32>
    %151 = arith.truncf %150 : vector<16x8xf32> to vector<16x8xbf16>
    %152 = vector.extract_strided_slice %19 {offsets = [16, 0], sizes = [8, 32], strides = [1, 1]} : vector<32x32xbf16> to vector<8x32xbf16>
    %cst_28 = arith.constant dense<0.000000e+00> : vector<16x32xf32>
    %153 = tpu.matmul %151, %152, %cst_28 {dimension_numbers = #tpu.dot_dimension_numbers<[1], [0], [0], [1], [0, 0, 1, 1], [], []>} : vector<16x8xbf16>, vector<8x32xbf16>, vector<16x32xf32> -> vector<16x32xf32>
    %154 = arith.addf %112, %153 : vector<16x32xf32>
    %155 = vector.extract_strided_slice %27 {offsets = [0, 0, 24], sizes = [2, 8, 8], strides = [1, 1, 1]} : vector<2x8x96xf32> to vector<2x8x8xf32>
    %156 = vector.extract_strided_slice %13 {offsets = [0, 24], sizes = [1, 8], strides = [1, 1]} : vector<1x32xf32> to vector<1x8xf32>
    %157 = vector.shape_cast %156 : vector<1x8xf32> to vector<1x1x8xf32>
    %158 = vector.broadcast %157 : vector<1x1x8xf32> to vector<2x8x8xf32>
    %159 = arith.addf %155, %158 : vector<2x8x8xf32>
    %160 = vector.extract_strided_slice %27 {offsets = [0, 0, 56], sizes = [2, 8, 8], strides = [1, 1, 1]} : vector<2x8x96xf32> to vector<2x8x8xf32>
    %161 = vector.extract_strided_slice %14 {offsets = [0, 24], sizes = [1, 8], strides = [1, 1]} : vector<1x32xf32> to vector<1x8xf32>
    %162 = vector.shape_cast %161 : vector<1x8xf32> to vector<1x1x8xf32>
    %163 = vector.broadcast %162 : vector<1x1x8xf32> to vector<2x8x8xf32>
    %164 = arith.addf %160, %163 : vector<2x8x8xf32>
    %165 = vector.extract_strided_slice %27 {offsets = [0, 0, 88], sizes = [2, 8, 8], strides = [1, 1, 1]} : vector<2x8x96xf32> to vector<2x8x8xf32>
    %166 = vector.extract_strided_slice %15 {offsets = [0, 24], sizes = [1, 8], strides = [1, 1]} : vector<1x32xf32> to vector<1x8xf32>
    %167 = vector.shape_cast %166 : vector<1x8xf32> to vector<1x1x8xf32>
    %168 = vector.broadcast %167 : vector<1x1x8xf32> to vector<2x8x8xf32>
    %169 = arith.addf %165, %168 : vector<2x8x8xf32>
    %170 = arith.truncf %159 : vector<2x8x8xf32> to vector<2x8x8xbf16>
    %171 = arith.truncf %164 : vector<2x8x8xf32> to vector<2x8x8xbf16>
    "tpu.trace_start"() <{level = 10 : i32, message = "bqd,bkd->bqk"}> : () -> ()
    %cst_29 = arith.constant dense<0.000000e+00> : vector<2x8x8xf32>
    %172 = tpu.matmul %170, %171, %cst_29 {dimension_numbers = #tpu.dot_dimension_numbers<[2], [2], [1], [1], [0, 0, 0, 1, 1, 1], [0], [0]>} : vector<2x8x8xbf16>, vector<2x8x8xbf16>, vector<2x8x8xf32> -> vector<2x8x8xf32>
    "tpu.trace_stop"() : () -> ()
    %cst_30 = arith.constant 0.353553385 : f32
    %173 = vector.broadcast %cst_30 : f32 to vector<2x8x8xf32>
    %174 = arith.mulf %172, %173 : vector<2x8x8xf32>
    %cst_31 = arith.constant dense<0xFF800000> : vector<2x8xf32>
    %175 = vector.multi_reduction <maximumf>, %174, %cst_31 [2] : vector<2x8x8xf32> to vector<2x8xf32>
    %176 = vector.shape_cast %175 : vector<2x8xf32> to vector<2x8x1xf32>
    %177 = vector.broadcast %176 : vector<2x8x1xf32> to vector<2x8x8xf32>
    %178 = arith.subf %174, %177 : vector<2x8x8xf32>
    %179 = math.exp %178 : vector<2x8x8xf32>
    %cst_32 = arith.constant dense<0.000000e+00> : vector<2x8xf32>
    %180 = vector.multi_reduction <add>, %179, %cst_32 [2] : vector<2x8x8xf32> to vector<2x8xf32>
    %181 = vector.shape_cast %180 : vector<2x8xf32> to vector<2x8x1xf32>
    %182 = tpu.reciprocal %181 {approx = true} : vector<2x8x1xf32> -> vector<2x8x1xf32>
    %183 = arith.mulf %181, %182 : vector<2x8x1xf32>
    %cst_33 = arith.constant 2.000000e+00 : f32
    %184 = vector.broadcast %cst_33 : f32 to vector<2x8x1xf32>
    %185 = arith.subf %184, %183 : vector<2x8x1xf32>
    %186 = arith.mulf %182, %185 : vector<2x8x1xf32>
    %187 = vector.broadcast %186 : vector<2x8x1xf32> to vector<2x8x8xf32>
    %188 = arith.mulf %179, %187 : vector<2x8x8xf32>
    %189 = arith.truncf %188 : vector<2x8x8xf32> to vector<2x8x8xbf16>
    %190 = arith.truncf %169 : vector<2x8x8xf32> to vector<2x8x8xbf16>
    "tpu.trace_start"() <{level = 10 : i32, message = "bqk,bkd->bqd"}> : () -> ()
    %cst_34 = arith.constant dense<0.000000e+00> : vector<2x8x8xf32>
    %191 = tpu.matmul %189, %190, %cst_34 {dimension_numbers = #tpu.dot_dimension_numbers<[2], [1], [1], [2], [0, 0, 0, 1, 1, 2], [0], [0]>} : vector<2x8x8xbf16>, vector<2x8x8xbf16>, vector<2x8x8xf32> -> vector<2x8x8xf32>
    "tpu.trace_stop"() : () -> ()
    %192 = vector.shape_cast %191 : vector<2x8x8xf32> to vector<16x8xf32>
    %193 = arith.truncf %192 : vector<16x8xf32> to vector<16x8xbf16>
    %194 = vector.extract_strided_slice %19 {offsets = [24, 0], sizes = [8, 32], strides = [1, 1]} : vector<32x32xbf16> to vector<8x32xbf16>
    %cst_35 = arith.constant dense<0.000000e+00> : vector<16x32xf32>
    %195 = tpu.matmul %193, %194, %cst_35 {dimension_numbers = #tpu.dot_dimension_numbers<[1], [0], [0], [1], [0, 0, 1, 1], [], []>} : vector<16x8xbf16>, vector<8x32xbf16>, vector<16x32xf32> -> vector<16x32xf32>
    %196 = arith.addf %154, %195 : vector<16x32xf32>
    %197 = vector.broadcast %4 : vector<1x32xf32> to vector<16x32xf32>
    %198 = arith.addf %196, %197 : vector<16x32xf32>
    %199 = arith.addf %0, %198 : vector<16x32xf32>
    %cst_36 = arith.constant dense<0.000000e+00> : vector<16xf32>
    %200 = vector.multi_reduction <add>, %199, %cst_36 [1] : vector<16x32xf32> to vector<16xf32>
    %201 = vector.shape_cast %200 : vector<16xf32> to vector<16x1xf32>
    %cst_37 = arith.constant 3.200000e+01 : f32
    %202 = vector.broadcast %cst_37 : f32 to vector<16x1xf32>
    %203 = arith.divf %201, %202 : vector<16x1xf32>
    %204 = arith.mulf %199, %199 : vector<16x32xf32>
    %cst_38 = arith.constant dense<0.000000e+00> : vector<16xf32>
    %205 = vector.multi_reduction <add>, %204, %cst_38 [1] : vector<16x32xf32> to vector<16xf32>
    %206 = vector.shape_cast %205 : vector<16xf32> to vector<16x1xf32>
    %cst_39 = arith.constant 3.200000e+01 : f32
    %207 = vector.broadcast %cst_39 : f32 to vector<16x1xf32>
    %208 = arith.divf %206, %207 : vector<16x1xf32>
    %209 = arith.mulf %203, %203 : vector<16x1xf32>
    %210 = arith.subf %208, %209 : vector<16x1xf32>
    %211 = vector.broadcast %203 : vector<16x1xf32> to vector<16x32xf32>
    %212 = arith.subf %199, %211 : vector<16x32xf32>
    %cst_40 = arith.constant 9.99999974E-6 : f32
    %213 = vector.broadcast %cst_40 : f32 to vector<16x1xf32>
    %214 = arith.addf %210, %213 : vector<16x1xf32>
    %215 = math.rsqrt %214 : vector<16x1xf32>
    %216 = vector.broadcast %215 : vector<16x1xf32> to vector<16x32xf32>
    %217 = arith.mulf %212, %216 : vector<16x32xf32>
    %218 = vector.broadcast %5 : vector<1x32xf32> to vector<16x32xf32>
    %219 = arith.mulf %217, %218 : vector<16x32xf32>
    %220 = vector.broadcast %6 : vector<1x32xf32> to vector<16x32xf32>
    %221 = arith.addf %219, %220 : vector<16x32xf32>
    %222 = arith.truncf %221 : vector<16x32xf32> to vector<16x32xbf16>
    %cst_41 = arith.constant dense<0.000000e+00> : vector<16x64xf32>
    %223 = tpu.matmul %222, %23, %cst_41 {dimension_numbers = #tpu.dot_dimension_numbers<[1], [0], [0], [1], [0, 0, 1, 1], [], []>} : vector<16x32xbf16>, vector<32x64xbf16>, vector<16x64xf32> -> vector<16x64xf32>
    %224 = vector.broadcast %18 : vector<1x64xf32> to vector<16x64xf32>
    %225 = arith.addf %223, %224 : vector<16x64xf32>
    %cst_42 = arith.constant 0.000000e+00 : f32
    %226 = vector.broadcast %cst_42 : f32 to vector<16x64xf32>
    %227 = arith.maximumf %225, %226 : vector<16x64xf32>
    %228 = arith.truncf %227 : vector<16x64xf32> to vector<16x64xbf16>
    %cst_43 = arith.constant dense<0.000000e+00> : vector<16x32xf32>
    %229 = tpu.matmul %228, %2, %cst_43 {dimension_numbers = #tpu.dot_dimension_numbers<[1], [0], [0], [1], [0, 0, 1, 1], [], []>} : vector<16x64xbf16>, vector<64x32xbf16>, vector<16x32xf32> -> vector<16x32xf32>
    %230 = vector.broadcast %7 : vector<1x32xf32> to vector<16x32xf32>
    %231 = arith.addf %229, %230 : vector<16x32xf32>
    %232 = arith.addf %221, %231 : vector<16x32xf32>
    %cst_44 = arith.constant dense<0.000000e+00> : vector<16xf32>
    %233 = vector.multi_reduction <add>, %232, %cst_44 [1] : vector<16x32xf32> to vector<16xf32>
    %234 = vector.shape_cast %233 : vector<16xf32> to vector<16x1xf32>
    %cst_45 = arith.constant 3.200000e+01 : f32
    %235 = vector.broadcast %cst_45 : f32 to vector<16x1xf32>
    %236 = arith.divf %234, %235 : vector<16x1xf32>
    %237 = arith.mulf %232, %232 : vector<16x32xf32>
    %cst_46 = arith.constant dense<0.000000e+00> : vector<16xf32>
    %238 = vector.multi_reduction <add>, %237, %cst_46 [1] : vector<16x32xf32> to vector<16xf32>
    %239 = vector.shape_cast %238 : vector<16xf32> to vector<16x1xf32>
    %cst_47 = arith.constant 3.200000e+01 : f32
    %240 = vector.broadcast %cst_47 : f32 to vector<16x1xf32>
    %241 = arith.divf %239, %240 : vector<16x1xf32>
    %242 = arith.mulf %236, %236 : vector<16x1xf32>
    %243 = arith.subf %241, %242 : vector<16x1xf32>
    %244 = vector.broadcast %236 : vector<16x1xf32> to vector<16x32xf32>
    %245 = arith.subf %232, %244 : vector<16x32xf32>
    %cst_48 = arith.constant 9.99999974E-6 : f32
    %246 = vector.broadcast %cst_48 : f32 to vector<16x1xf32>
    %247 = arith.addf %243, %246 : vector<16x1xf32>
    %248 = math.rsqrt %247 : vector<16x1xf32>
    %249 = vector.broadcast %248 : vector<16x1xf32> to vector<16x32xf32>
    %250 = arith.mulf %245, %249 : vector<16x32xf32>
    %251 = vector.broadcast %8 : vector<1x32xf32> to vector<16x32xf32>
    %252 = arith.mulf %250, %251 : vector<16x32xf32>
    %253 = vector.broadcast %9 : vector<1x32xf32> to vector<16x32xf32>
    %254 = arith.addf %252, %253 : vector<16x32xf32>
    %255 = arith.truncf %254 : vector<16x32xf32> to vector<16x32xbf16>
    %cst_49 = arith.constant dense<0.000000e+00> : vector<16x32xf32>
    %256 = tpu.matmul %255, %20, %cst_49 {dimension_numbers = #tpu.dot_dimension_numbers<[1], [0], [0], [1], [0, 0, 1, 1], [], []>} : vector<16x32xbf16>, vector<32x32xbf16>, vector<16x32xf32> -> vector<16x32xf32>
    %257 = vector.broadcast %10 : vector<1x32xf32> to vector<16x32xf32>
    %258 = arith.addf %256, %257 : vector<16x32xf32>
    %cst_50 = arith.constant 0.000000e+00 : f32
    %259 = vector.broadcast %cst_50 : f32 to vector<16x32xf32>
    %260 = arith.cmpf ogt, %258, %259 : vector<16x32xf32>
    %cst_51 = arith.constant 0.000000e+00 : f32
    %261 = vector.broadcast %cst_51 : f32 to vector<16x32xf32>
    %262 = arith.minimumf %258, %261 : vector<16x32xf32>
    %263 = math.exp %262 : vector<16x32xf32>
    %cst_52 = arith.constant 1.000000e+00 : f32
    %264 = vector.broadcast %cst_52 : f32 to vector<16x32xf32>
    %265 = arith.subf %263, %264 : vector<16x32xf32>
    %266 = arith.select %260, %258, %265 : vector<16x32xi1>, vector<16x32xf32>
    %267 = arith.truncf %266 : vector<16x32xf32> to vector<16x32xbf16>
    %cst_53 = arith.constant dense<0.000000e+00> : vector<16x32xf32>
    %268 = tpu.matmul %267, %21, %cst_53 {dimension_numbers = #tpu.dot_dimension_numbers<[1], [0], [0], [1], [0, 0, 1, 1], [], []>} : vector<16x32xbf16>, vector<32x32xbf16>, vector<16x32xf32> -> vector<16x32xf32>
    %269 = vector.broadcast %11 : vector<1x32xf32> to vector<16x32xf32>
    %270 = arith.addf %268, %269 : vector<16x32xf32>
    %271 = arith.truncf %270 : vector<16x32xf32> to vector<16x32xbf16>
    %cst_54 = arith.constant dense<0.000000e+00> : vector<16x32xf32>
    %272 = tpu.matmul %271, %22, %cst_54 {dimension_numbers = #tpu.dot_dimension_numbers<[1], [0], [0], [1], [0, 0, 1, 1], [], []>} : vector<16x32xbf16>, vector<32x32xbf16>, vector<16x32xf32> -> vector<16x32xf32>
    %273 = vector.broadcast %12 : vector<1x32xf32> to vector<16x32xf32>
    %274 = arith.addf %272, %273 : vector<16x32xf32>
    %275 = arith.negf %274 : vector<16x32xf32>
    %276 = math.exp %275 : vector<16x32xf32>
    %cst_55 = arith.constant 1.000000e+00 : f32
    %277 = vector.broadcast %cst_55 : f32 to vector<16x32xf32>
    %278 = arith.addf %277, %276 : vector<16x32xf32>
    %279 = arith.divf %277, %278 : vector<16x32xf32>
    %280 = arith.mulf %270, %279 : vector<16x32xf32>
    %cst_56 = arith.constant 1.000000e+00 : f32
    %281 = vector.broadcast %cst_56 : f32 to vector<16x32xf32>
    %282 = arith.subf %281, %279 : vector<16x32xf32>
    %283 = arith.mulf %282, %254 : vector<16x32xf32>
    %284 = arith.addf %280, %283 : vector<16x32xf32>
    %c0_57 = arith.constant 0 : index
    %c0_58 = arith.constant 0 : index
    %285 = vector.load %arg5[%c0_57, %c0_58] : memref<16x32xf32, #tpu.memory_space<vmem>>, vector<16x32xf32>
    tpu.vector_store %arg5[%c0_57, %c0_58], %284 {strides = array<i32>} : memref<16x32xf32, #tpu.memory_space<vmem>>, vector<16x32xf32>,
    return
  }
  func.func @transform_0(%arg0: i32) -> (i32, i32) {
    %c0_i32 = arith.constant 0 : i32
    %c0_i32_0 = arith.constant 0 : i32
    return %arg0, %c0_i32 : i32, i32
  }
  func.func @transform_1(%arg0: i32) -> (i32, i32) {
    %c0_i32 = arith.constant 0 : i32
    %c0_i32_0 = arith.constant 0 : i32
    %c0_i32_1 = arith.constant 0 : i32
    return %c0_i32, %c0_i32_0 : i32, i32
  }
  func.func @transform_2(%arg0: i32) -> (i32, i32) {
    %c0_i32 = arith.constant 0 : i32
    %c0_i32_0 = arith.constant 0 : i32
    %c0_i32_1 = arith.constant 0 : i32
    return %c0_i32, %c0_i32_0 : i32, i32
  }
  func.func @transform_3(%arg0: i32) -> (i32, i32) {
    %c0_i32 = arith.constant 0 : i32
    %c0_i32_0 = arith.constant 0 : i32
    %c0_i32_1 = arith.constant 0 : i32
    return %c0_i32, %c0_i32_0 : i32, i32
  }
  func.func @transform_4(%arg0: i32) -> (i32, i32) {
    %c0_i32 = arith.constant 0 : i32
    %c0_i32_0 = arith.constant 0 : i32
    return %arg0, %c0_i32 : i32, i32
  }
}

</mosaic_0001>

<llo_original>
// kernel: tpu_custom_call.1
$region0: #{tpu_custom_call.1}
  #allocation0 [shape = 'u32[]', space=smem, size = 0x4, offset = 0x4, fixed_abs, tag = 'smem constant byte address 0x4 - core index']
  #allocation1 [shape = 'u32[144,128]{1,0:T(1,128)}', space=vmem, size = 0x12000, scoped, tag = 'internal scratch']
  %s0 = inlined_call_operand.hbm [shape: f32[16,32], index: 0, kind: input, shape index: {}]
  %s1 = inlined_call_operand.vmem [shape: bf16[32,288], index: 1, kind: input, shape index: {}]
  %s2 = inlined_call_operand.vmem [shape: bf16[64,32], index: 2, kind: input, shape index: {}]
  %s3 = inlined_call_operand.hbm [shape: f32[14,32], index: 3, kind: input, shape index: {}]
  %s4 = inlined_call_operand.hbm [shape: f32[16,32], index: 4, kind: output, shape index: {}]
  %s5 = sld [smem:[#allocation0]]
  $region34: #{tpu_custom_call.1} parent=0
    _
  %s7 = ssub.s32 1, %s5
  %s8 = scalar_select 0, %s7, %s5
  $region1: #{tpu_custom_call.1} parent=0
    #allocation2 [shape = 'u8[8192]{0}', space=vmem, size = 0x2000, scoped, tag = 'input window, operand 0, single buffered']
    #allocation3 [shape = 's32[1]{0}', space=sflag, size = 0x4, scoped, tag = 'scoped memory for tpu_custom_call.1']
    #allocation4 [shape = 's32[1]{0}', space=sflag, size = 0x4, scoped, tag = 'scoped memory for tpu_custom_call.1']
    #allocation5 [shape = 'u8[8192]{0}', space=vmem, size = 0x2000, scoped, tag = 'input window, operand 3, single buffered']
    #allocation6 [shape = 's32[1]{0}', space=sflag, size = 0x4, scoped, tag = 'scoped memory for tpu_custom_call.1']
    #allocation7 [shape = 'u8[8192]{0}', space=vmem, size = 0x2000, scoped, tag = 'output window, operand 0, single buffered']
    %9 = vsyncpa [#allocation3], 0
    %10 = vsyncpa [#allocation6], 0
    %11 = vsyncpa [#allocation4], 0
    // Predicated region
    $region2: #{tpu_custom_call.1} parent=1 // pred_check
      _
    $region3: #{tpu_custom_call.1} parent=1 // pred_check_branch
      %13 = sbr.rel (0) target = $region5
    $region4: #{tpu_custom_call.1} parent=1 // pred_region
      %s15 = ssub.s32 256, 256
      %16 = vsyncadd [#allocation3], %s15
      %s17 = sshll.u32 [#allocation2], 4
      %s18 = int_to_ptr.vmem [resolvable:$true] %s17
      %23 = dma.hbm_to_vmem [thread:$0]  %s0, 256, %s18, [#allocation3], 128, 128, 8
    $region5: #{tpu_custom_call.1} parent=1 // pred_fallthru
      _
    // Predicated region
    $region6: #{tpu_custom_call.1} parent=1 // pred_check
      _
    $region7: #{tpu_custom_call.1} parent=1 // pred_check_branch
      %25 = sbr.rel (0) target = $region9
    $region8: #{tpu_custom_call.1} parent=1 // pred_region
      _
    $region9: #{tpu_custom_call.1} parent=1 // pred_fallthru
      _
    // Predicated region
    $region10: #{tpu_custom_call.1} parent=1 // pred_check
      _
    $region11: #{tpu_custom_call.1} parent=1 // pred_check_branch
      %27 = sbr.rel (0) target = $region13
    $region12: #{tpu_custom_call.1} parent=1 // pred_region
      _
    $region13: #{tpu_custom_call.1} parent=1 // pred_fallthru
      _
    // Predicated region
    $region14: #{tpu_custom_call.1} parent=1 // pred_check
      _
    $region15: #{tpu_custom_call.1} parent=1 // pred_check_branch
      %29 = sbr.rel (0) target = $region17
    $region16: #{tpu_custom_call.1} parent=1 // pred_region
      %s31 = ssub.s32 256, 256
      %32 = vsyncadd [#allocation6], %s31
      %s33 = sshll.u32 [#allocation5], 4
      %s34 = int_to_ptr.vmem [resolvable:$true] %s33
      %39 = dma.hbm_to_vmem [thread:$0]  %s3, 256, %s34, [#allocation6], 128, 128, 8
    $region17: #{tpu_custom_call.1} parent=1 // pred_fallthru
      _
    // Predicated region
    $region18: #{tpu_custom_call.1} parent=1 // pred_check
      _
    $region19: #{tpu_custom_call.1} parent=1 // pred_check_branch
      %41 = sbr.rel (0) target = $region21
    $region20: #{tpu_custom_call.1} parent=1 // pred_region
      %42 = dma.done [#allocation3], 256
    $region21: #{tpu_custom_call.1} parent=1 // pred_fallthru
      _
    // Predicated region
    $region22: #{tpu_custom_call.1} parent=1 // pred_check
      _
    $region23: #{tpu_custom_call.1} parent=1 // pred_check_branch
      %44 = sbr.rel (0) target = $region25
    $region24: #{tpu_custom_call.1} parent=1 // pred_region
      %45 = dma.done [#allocation6], 256
    $region25: #{tpu_custom_call.1} parent=1 // pred_fallthru
      _
    %v47 = vld [vmem:[#allocation2] sm:$0xff]
    %v48 = vld [vmem:[#allocation2 + $0x8] sm:$0xff]
    %v49 = vld [vmem:[%s1] sm:$0xff]
    %v50 = vld [vmem:[%s1 + $0x8] sm:$0xf]
    %v51 = vld [vmem:[%s1 + $0xc] sm:$0xff]
    %v52 = vld [vmem:[%s1 + $0x14] sm:$0xf]
    %v53 = vld [vmem:[%s1 + $0x18] sm:$0xff]
    %v54 = vld [vmem:[%s1 + $0x20] sm:$0xf]
    %v55 = vld [vmem:[%s1 + $0x24] sm:$0xff]
    %v56 = vld [vmem:[%s1 + $0x2c] sm:$0xf]
    %v57 = vld [vmem:[%s2] sm:$0xf]
    %v58 = vld [vmem:[%s2 + $0x4] sm:$0xf]
    %v59 = vld [vmem:[%s2 + $0x8] sm:$0xf]
    %v60 = vld [vmem:[%s2 + $0xc] sm:$0xf]
    %v61 = vld [vmem:[%s2 + $0x10] sm:$0xf]
    %v62 = vld [vmem:[%s2 + $0x14] sm:$0xf]
    %v63 = vld [vmem:[%s2 + $0x18] sm:$0xf]
    %v64 = vld [vmem:[%s2 + $0x1c] sm:$0xf]
    %v65 = vld [vmem:[#allocation5] sm:$0xff]
    %v66 = vld [vmem:[#allocation5 + $0x8] sm:$0x3f]
    %v68 = vrot.slane %v66, 1
    %69 = vrot.lane.b32.xlu0 %v68, 32
    %v70 = vpop.permute.xlu0 %69
    %vm72 = vcmask 261120
    %v73 = vsel %vm72, %v66, %v70
    %v74 = vpack.c.bf16 %v48, %v47
    %v79 = vunpack.c.l.b16 %v49
    %v80 = vunpack.c.l.b16 %v51
    %v81 = vunpack.c.l.b16 %v53
    %v82 = vunpack.c.l.b16 %v55
    %v83 = vpack.c.b16 %v80, %v79
    %v84 = vpack.c.b16 %v82, %v81
    %v88 = vsel %vm72, %v74, 0
    %90 = vmatprep.subr.bf16.mxu0 0
    %91 = vmatpush1.bf16.msra.mxu0 %v83
    %92 = vmatprep.subr.bf16.mxu0 0
    %93 = vmatpush1.bf16.msra.mxu0 %v84
    %94 = vmatprep.subr.bf16.mxu0 0
    %95 = vmatpush1.bf16.msra.mxu0 0
    %96 = vmatprep.subr.bf16.mxu0 0
    %97 = vmatpush1.bf16.msra.mxu0 0
    %98 = vmatprep.subr.bf16.mxu0 0
    %99 = vmatpush1.bf16.msra.mxu0 0
    %100 = vmatprep.subr.bf16.mxu0 0
    %101 = vmatpush1.bf16.msra.mxu0 0
    %102 = vmatprep.subr.bf16.mxu0 0
    %103 = vmatpush1.bf16.msra.mxu0 0
    %104 = vmatprep.subr.bf16.mxu0 0
    %105 = vmatpush1.bf16.msra.mxu0 0
    %106 = vmatprep.subr.bf16.mxu0 0
    %107 = vmatpush1.bf16.msra.mxu0 0
    %108 = vmatprep.subr.bf16.mxu0 0
    %109 = vmatpush1.bf16.msra.mxu0 0
    %110 = vmatprep.subr.bf16.mxu0 0
    %111 = vmatpush1.bf16.msra.mxu0 0
    %112 = vmatprep.subr.bf16.mxu0 0
    %113 = vmatpush1.bf16.msra.mxu0 0
    %114 = vmatprep.subr.bf16.mxu0 0
    %115 = vmatpush1.bf16.msra.mxu0 0
    %116 = vmatprep.subr.bf16.mxu0 0
    %117 = vmatpush1.bf16.msra.mxu0 0
    %118 = vmatprep.subr.bf16.mxu0 0
    %119 = vmatpush1.bf16.msra.mxu0 0
    %120 = vmatprep.subr.bf16.mxu0 0
    %121 = vmatpush1.bf16.msra.mxu0 0
    %122 = vmatprep.mubr.bf16.mxu0 0
    %123 = vmatmul.mubr.bf16.gmra.mrb[0].mxu0 %v88
    %v124 = vpop.f32.mrb[0].mxu0
    %v125 = vadd.f32 0.0, %v124
    %v126 = vpop.f32.mrb[0].mxu0
    %v127 = vpop.f32.mrb[0].mxu0
    %v128 = vadd.f32 0.0, %v127
    %v129 = vpop.f32.mrb[0].mxu0
    %130 = vdwg.mxu0
    %v131 = vlaneseq
    %v132 = vshrl.u32 %v131, 7
    %v133 = vsub.s32 1, %v132
    %v134 = vrot.slane %v66, %v133
    %v135 = vadd.f32 %v125, %v134
    %v136 = vadd.f32 %v128, %v134
    %v137 = vlaneseq
    %v138 = vshrl.u32 %v137, 7
    %v139 = vsub.s32 2, %v138
    %v140 = vrot.slane %v66, %v139
    %142 = vrot.lane.b32.xlu0 %v140, 32
    %v143 = vpop.permute.xlu0 %142
    %v145 = vadd.f32 %v125, %v143
    %v146 = vadd.f32 %v128, %v143
    %v147 = vlaneseq
    %v148 = vshrl.u32 %v147, 7
    %v149 = vsub.s32 3, %v148
    %v150 = vrot.slane %v66, %v149
    %152 = vrot.lane.b32.xlu0 %v150, 64
    %v153 = vpop.permute.xlu0 %152
    %v155 = vadd.f32 %v125, %v153
    %v156 = vadd.f32 %v128, %v153
    %v157 = vpack.c.bf16 %v135, %v135
    %v158 = vpack.c.bf16 %v136, %v136
    %v159 = vpack.c.bf16 %v145, %v145
    %v160 = vpack.c.bf16 %v146, %v146
    %162 = vrot.lane.b32.xlu0 %v159, 96
    %v163 = vpop.permute.xlu0 %162
    %vm164 = vcmask 64512
    %v166 = vsel %vm164, %v157, 0
    %v169 = vsel %vm164, %v163, 0
    %171 = vmatprep.subr.bf16.mxu0 0
    %172 = vmatpush1.bf16.xpose.msra.mxu0 %v169
    %173 = vmatprep.subr.bf16.mxu0 0
    %174 = vmatpush1.bf16.xpose.msra.mxu0 0
    %175 = vmatprep.subr.bf16.mxu0 0
    %176 = vmatpush1.bf16.xpose.msra.mxu0 0
    %177 = vmatprep.subr.bf16.mxu0 0
    %178 = vmatpush1.bf16.xpose.msra.mxu0 0
    %179 = vmatprep.subr.bf16.mxu0 0
    %180 = vmatpush1.bf16.xpose.msra.mxu0 0
    %181 = vmatprep.subr.bf16.mxu0 0
    %182 = vmatpush1.bf16.xpose.msra.mxu0 0
    %183 = vmatprep.subr.bf16.mxu0 0
    %184 = vmatpush1.bf16.xpose.msra.mxu0 0
    %185 = vmatprep.subr.bf16.mxu0 0
    %186 = vmatpush1.bf16.xpose.msra.mxu0 0
    %187 = vmatprep.subr.bf16.mxu0 0
    %188 = vmatpush1.bf16.xpose.msra.mxu0 0
    %189 = vmatprep.subr.bf16.mxu0 0
    %190 = vmatpush1.bf16.xpose.msra.mxu0 0
    %191 = vmatprep.subr.bf16.mxu0 0
    %192 = vmatpush1.bf16.xpose.msra.mxu0 0
    %193 = vmatprep.subr.bf16.mxu0 0
    %194 = vmatpush1.bf16.xpose.msra.mxu0 0
    %195 = vmatprep.subr.bf16.mxu0 0
    %196 = vmatpush1.bf16.xpose.msra.mxu0 0
    %197 = vmatprep.subr.bf16.mxu0 0
    %198 = vmatpush1.bf16.xpose.msra.mxu0 0
    %199 = vmatprep.subr.bf16.mxu0 0
    %200 = vmatpush1.bf16.xpose.msra.mxu0 0
    %201 = vmatprep.subr.bf16.mxu0 0
    %202 = vmatpush1.bf16.xpose.msra.mxu0 0
    %203 = vmatprep.mubr.bf16.mxu0 0
    %204 = vmatmul.mubr.bf16.gmra.mrb[0].mxu0 %v166
    %v205 = vpop.f32.mrb[0].mxu0
    %v206 = vadd.f32 0.0, %v205
    %v207 = vpop.f32.mrb[0].mxu0
    %v208 = vpop.f32.mrb[0].mxu0
    %v209 = vpop.f32.mrb[0].mxu0
    %210 = vdwg.mxu0
    %212 = vrot.lane.b32.xlu0 %v160, 96
    %v213 = vpop.permute.xlu0 %212
    %v215 = vsel %vm164, %v158, 0
    %v218 = vsel %vm164, %v213, 0
    %220 = vmatprep.subr.bf16.mxu0 0
    %221 = vmatpush1.bf16.xpose.msra.mxu0 %v218
    %222 = vmatprep.subr.bf16.mxu0 0
    %223 = vmatpush1.bf16.xpose.msra.mxu0 0
    %224 = vmatprep.subr.bf16.mxu0 0
    %225 = vmatpush1.bf16.xpose.msra.mxu0 0
    %226 = vmatprep.subr.bf16.mxu0 0
    %227 = vmatpush1.bf16.xpose.msra.mxu0 0
    %228 = vmatprep.subr.bf16.mxu0 0
    %229 = vmatpush1.bf16.xpose.msra.mxu0 0
    %230 = vmatprep.subr.bf16.mxu0 0
    %231 = vmatpush1.bf16.xpose.msra.mxu0 0
    %232 = vmatprep.subr.bf16.mxu0 0
    %233 = vmatpush1.bf16.xpose.msra.mxu0 0
    %234 = vmatprep.subr.bf16.mxu0 0
    %235 = vmatpush1.bf16.xpose.msra.mxu0 0
    %236 = vmatprep.subr.bf16.mxu0 0
    %237 = vmatpush1.bf16.xpose.msra.mxu0 0
    %238 = vmatprep.subr.bf16.mxu0 0
    %239 = vmatpush1.bf16.xpose.msra.mxu0 0
    %240 = vmatprep.subr.bf16.mxu0 0
    %241 = vmatpush1.bf16.xpose.msra.mxu0 0
    %242 = vmatprep.subr.bf16.mxu0 0
    %243 = vmatpush1.bf16.xpose.msra.mxu0 0
    %244 = vmatprep.subr.bf16.mxu0 0
    %245 = vmatpush1.bf16.xpose.msra.mxu0 0
    %246 = vmatprep.subr.bf16.mxu0 0
    %247 = vmatpush1.bf16.xpose.msra.mxu0 0
    %248 = vmatprep.subr.bf16.mxu0 0
    %249 = vmatpush1.bf16.xpose.msra.mxu0 0
    %250 = vmatprep.subr.bf16.mxu0 0
    %251 = vmatpush1.bf16.xpose.msra.mxu0 0
    %252 = vmatprep.mubr.bf16.mxu0 0
    %253 = vmatmul.mubr.bf16.gmra.mrb[0].mxu0 %v215
    %v254 = vpop.f32.mrb[0].mxu0
    %v255 = vadd.f32 0.0, %v254
    %v256 = vpop.f32.mrb[0].mxu0
    %v257 = vpop.f32.mrb[0].mxu0
    %v258 = vpop.f32.mrb[0].mxu0
    %259 = vdwg.mxu0
    %v260 = vmul.f32 %v206, 0.35355338
    %v261 = vmul.f32 %v255, 0.35355338
    %v262 = vsel %vm164, %v260, -inf
    %263 = vmax.xlane.f32.xlu0 %v262
    %v264 = vpop.xlane.xlu0 %263
    %v265 = vsel %vm164, %v261, -inf
    %266 = vmax.xlane.f32.xlu0 %v265
    %v267 = vpop.xlane.xlu0 %266
    %v268 = vsub.f32 %v260, %v264
    %v269 = vsub.f32 %v261, %v267
    %v270 = vmul.f32 %v268, 1.442695
    %v271 = vpow.pop %v270
    %v272 = vmul.f32 %v269, 1.442695
    %v273 = vpow.pop %v272
    %v274 = vsel %vm164, %v271, 0.0
    %275 = vadd.xlane.f32.xlu0 %v274
    %v276 = vpop.xlane.xlu0 %275
    %v277 = vsel %vm164, %v273, 0.0
    %278 = vadd.xlane.f32.xlu0 %v277
    %v279 = vpop.xlane.xlu0 %278
    %v280 = vrcp.pop %v276
    %v281 = vrcp.pop %v279
    %v282 = vmul.f32 %v276, %v280
    %v283 = vmul.f32 %v279, %v281
    %v284 = vsub.f32 2.0, %v282
    %v285 = vsub.f32 2.0, %v283
    %v286 = vmul.f32 %v280, %v284
    %v287 = vmul.f32 %v281, %v285
    %v288 = vmul.f32 %v271, %v286
    %v289 = vmul.f32 %v273, %v287
    %v290 = vpack.c.bf16 %v288, %v288
    %v291 = vpack.c.bf16 %v289, %v289
    %v292 = vpack.c.bf16 %v155, %v155
    %v293 = vpack.c.bf16 %v156, %v156
    %295 = vrot.lane.b32.xlu0 %v292, 64
    %v296 = vpop.permute.xlu0 %295
    %v298 = vsel %vm164, %v290, 0
    %vm300 = vcmask 1043456
    %v302 = vsel %vm300, %v296, 0
    %304 = vmatprep.subr.bf16.mxu0 0
    %305 = vmatpush1.bf16.msra.mxu0 %v302
    %306 = vmatprep.subr.bf16.mxu0 0
    %307 = vmatpush1.bf16.msra.mxu0 0
    %308 = vmatprep.subr.bf16.mxu0 0
    %309 = vmatpush1.bf16.msra.mxu0 0
    %310 = vmatprep.subr.bf16.mxu0 0
    %311 = vmatpush1.bf16.msra.mxu0 0
    %312 = vmatprep.subr.bf16.mxu0 0
    %313 = vmatpush1.bf16.msra.mxu0 0
    %314 = vmatprep.subr.bf16.mxu0 0
    %315 = vmatpush1.bf16.msra.mxu0 0
    %316 = vmatprep.subr.bf16.mxu0 0
    %317 = vmatpush1.bf16.msra.mxu0 0
    %318 = vmatprep.subr.bf16.mxu0 0
    %319 = vmatpush1.bf16.msra.mxu0 0
    %320 = vmatprep.subr.bf16.mxu0 0
    %321 = vmatpush1.bf16.msra.mxu0 0
    %322 = vmatprep.subr.bf16.mxu0 0
    %323 = vmatpush1.bf16.msra.mxu0 0
    %324 = vmatprep.subr.bf16.mxu0 0
    %325 = vmatpush1.bf16.msra.mxu0 0
    %326 = vmatprep.subr.bf16.mxu0 0
    %327 = vmatpush1.bf16.msra.mxu0 0
    %328 = vmatprep.subr.bf16.mxu0 0
    %329 = vmatpush1.bf16.msra.mxu0 0
    %330 = vmatprep.subr.bf16.mxu0 0
    %331 = vmatpush1.bf16.msra.mxu0 0
    %332 = vmatprep.subr.bf16.mxu0 0
    %333 = vmatpush1.bf16.msra.mxu0 0
    %334 = vmatprep.subr.bf16.mxu0 0
    %335 = vmatpush1.bf16.msra.mxu0 0
    %336 = vmatprep.mubr.bf16.mxu0 0
    %337 = vmatmul.mubr.bf16.gmra.mrb[0].mxu0 %v298
    %v338 = vpop.f32.mrb[0].mxu0
    %v339 = vadd.f32 0.0, %v338
    %v340 = vpop.f32.mrb[0].mxu0
    %v341 = vpop.f32.mrb[0].mxu0
    %v342 = vpop.f32.mrb[0].mxu0
    %343 = vdwg.mxu0
    %345 = vrot.lane.b32.xlu0 %v293, 64
    %v346 = vpop.permute.xlu0 %345
    %v348 = vsel %vm164, %v291, 0
    %v351 = vsel %vm300, %v346, 0
    %353 = vmatprep.subr.bf16.mxu0 0
    %354 = vmatpush1.bf16.msra.mxu0 %v351
    %355 = vmatprep.subr.bf16.mxu0 0
    %356 = vmatpush1.bf16.msra.mxu0 0
    %357 = vmatprep.subr.bf16.mxu0 0
    %358 = vmatpush1.bf16.msra.mxu0 0
    %359 = vmatprep.subr.bf16.mxu0 0
    %360 = vmatpush1.bf16.msra.mxu0 0
    %361 = vmatprep.subr.bf16.mxu0 0
    %362 = vmatpush1.bf16.msra.mxu0 0
    %363 = vmatprep.subr.bf16.mxu0 0
    %364 = vmatpush1.bf16.msra.mxu0 0
    %365 = vmatprep.subr.bf16.mxu0 0
    %366 = vmatpush1.bf16.msra.mxu0 0
    %367 = vmatprep.subr.bf16.mxu0 0
    %368 = vmatpush1.bf16.msra.mxu0 0
    %369 = vmatprep.subr.bf16.mxu0 0
    %370 = vmatpush1.bf16.msra.mxu0 0
    %371 = vmatprep.subr.bf16.mxu0 0
    %372 = vmatpush1.bf16.msra.mxu0 0
    %373 = vmatprep.subr.bf16.mxu0 0
    %374 = vmatpush1.bf16.msra.mxu0 0
    %375 = vmatprep.subr.bf16.mxu0 0
    %376 = vmatpush1.bf16.msra.mxu0 0
    %377 = vmatprep.subr.bf16.mxu0 0
    %378 = vmatpush1.bf16.msra.mxu0 0
    %379 = vmatprep.subr.bf16.mxu0 0
    %380 = vmatpush1.bf16.msra.mxu0 0
    %381 = vmatprep.subr.bf16.mxu0 0
    %382 = vmatpush1.bf16.msra.mxu0 0
    %383 = vmatprep.subr.bf16.mxu0 0
    %384 = vmatpush1.bf16.msra.mxu0 0
    %385 = vmatprep.mubr.bf16.mxu0 0
    %386 = vmatmul.mubr.bf16.gmra.mrb[0].mxu0 %v348
    %v387 = vpop.f32.mrb[0].mxu0
    %v388 = vadd.f32 0.0, %v387
    %v389 = vpop.f32.mrb[0].mxu0
    %v390 = vpop.f32.mrb[0].mxu0
    %v391 = vpop.f32.mrb[0].mxu0
    %392 = vdwg.mxu0
    %v393 = vpack.c.bf16 %v388, %v339
    %395 = vrot.lane.b32.xlu0 %v157, 120
    %v396 = vpop.permute.xlu0 %395
    %397 = vrot.lane.b32.xlu0 %v159, 88
    %v398 = vpop.permute.xlu0 %397
    %v400 = vsel %vm164, %v396, 0
    %v403 = vsel %vm164, %v398, 0
    %405 = vmatprep.subr.bf16.mxu0 0
    %406 = vmatpush1.bf16.xpose.msra.mxu0 %v403
    %407 = vmatprep.subr.bf16.mxu0 0
    %408 = vmatpush1.bf16.xpose.msra.mxu0 0
    %409 = vmatprep.subr.bf16.mxu0 0
    %410 = vmatpush1.bf16.xpose.msra.mxu0 0
    %411 = vmatprep.subr.bf16.mxu0 0
    %412 = vmatpush1.bf16.xpose.msra.mxu0 0
    %413 = vmatprep.subr.bf16.mxu0 0
    %414 = vmatpush1.bf16.xpose.msra.mxu0 0
    %415 = vmatprep.subr.bf16.mxu0 0
    %416 = vmatpush1.bf16.xpose.msra.mxu0 0
    %417 = vmatprep.subr.bf16.mxu0 0
    %418 = vmatpush1.bf16.xpose.msra.mxu0 0
    %419 = vmatprep.subr.bf16.mxu0 0
    %420 = vmatpush1.bf16.xpose.msra.mxu0 0
    %421 = vmatprep.subr.bf16.mxu0 0
    %422 = vmatpush1.bf16.xpose.msra.mxu0 0
    %423 = vmatprep.subr.bf16.mxu0 0
    %424 = vmatpush1.bf16.xpose.msra.mxu0 0
    %425 = vmatprep.subr.bf16.mxu0 0
    %426 = vmatpush1.bf16.xpose.msra.mxu0 0
    %427 = vmatprep.subr.bf16.mxu0 0
    %428 = vmatpush1.bf16.xpose.msra.mxu0 0
    %429 = vmatprep.subr.bf16.mxu0 0
    %430 = vmatpush1.bf16.xpose.msra.mxu0 0
    %431 = vmatprep.subr.bf16.mxu0 0
    %432 = vmatpush1.bf16.xpose.msra.mxu0 0
    %433 = vmatprep.subr.bf16.mxu0 0
    %434 = vmatpush1.bf16.xpose.msra.mxu0 0
    %435 = vmatprep.subr.bf16.mxu0 0
    %436 = vmatpush1.bf16.xpose.msra.mxu0 0
    %437 = vmatprep.mubr.bf16.mxu0 0
    %438 = vmatmul.mubr.bf16.gmra.mrb[0].mxu0 %v400
    %v439 = vpop.f32.mrb[0].mxu0
    %v440 = vadd.f32 0.0, %v439
    %v441 = vpop.f32.mrb[0].mxu0
    %v442 = vpop.f32.mrb[0].mxu0
    %v443 = vpop.f32.mrb[0].mxu0
    %444 = vdwg.mxu0
    %446 = vrot.lane.b32.xlu0 %v158, 120
    %v447 = vpop.permute.xlu0 %446
    %448 = vrot.lane.b32.xlu0 %v160, 88
    %v449 = vpop.permute.xlu0 %448
    %v451 = vsel %vm164, %v447, 0
    %v454 = vsel %vm164, %v449, 0
    %456 = vmatprep.subr.bf16.mxu0 0
    %457 = vmatpush1.bf16.xpose.msra.mxu0 %v454
    %458 = vmatprep.subr.bf16.mxu0 0
    %459 = vmatpush1.bf16.xpose.msra.mxu0 0
    %460 = vmatprep.subr.bf16.mxu0 0
    %461 = vmatpush1.bf16.xpose.msra.mxu0 0
    %462 = vmatprep.subr.bf16.mxu0 0
    %463 = vmatpush1.bf16.xpose.msra.mxu0 0
    %464 = vmatprep.subr.bf16.mxu0 0
    %465 = vmatpush1.bf16.xpose.msra.mxu0 0
    %466 = vmatprep.subr.bf16.mxu0 0
    %467 = vmatpush1.bf16.xpose.msra.mxu0 0
    %468 = vmatprep.subr.bf16.mxu0 0
    %469 = vmatpush1.bf16.xpose.msra.mxu0 0
    %470 = vmatprep.subr.bf16.mxu0 0
    %471 = vmatpush1.bf16.xpose.msra.mxu0 0
    %472 = vmatprep.subr.bf16.mxu0 0
    %473 = vmatpush1.bf16.xpose.msra.mxu0 0
    %474 = vmatprep.subr.bf16.mxu0 0
    %475 = vmatpush1.bf16.xpose.msra.mxu0 0
    %476 = vmatprep.subr.bf16.mxu0 0
    %477 = vmatpush1.bf16.xpose.msra.mxu0 0
    %478 = vmatprep.subr.bf16.mxu0 0
    %479 = vmatpush1.bf16.xpose.msra.mxu0 0
    %480 = vmatprep.subr.bf16.mxu0 0
    %481 = vmatpush1.bf16.xpose.msra.mxu0 0
    %482 = vmatprep.subr.bf16.mxu0 0
    %483 = vmatpush1.bf16.xpose.msra.mxu0 0
    %484 = vmatprep.subr.bf16.mxu0 0
    %485 = vmatpush1.bf16.xpose.msra.mxu0 0
    %486 = vmatprep.subr.bf16.mxu0 0
    %487 = vmatpush1.bf16.xpose.msra.mxu0 0
    %488 = vmatprep.mubr.bf16.mxu0 0
    %489 = vmatmul.mubr.bf16.gmra.mrb[0].mxu0 %v451
    %v490 = vpop.f32.mrb[0].mxu0
    %v491 = vadd.f32 0.0, %v490
    %v492 = vpop.f32.mrb[0].mxu0
    %v493 = vpop.f32.mrb[0].mxu0
    %v494 = vpop.f32.mrb[0].mxu0
    %495 = vdwg.mxu0
    %v496 = vmul.f32 %v440, 0.35355338
    %v497 = vmul.f32 %v491, 0.35355338
    %v498 = vsel %vm164, %v496, -inf
    %499 = vmax.xlane.f32.xlu0 %v498
    %v500 = vpop.xlane.xlu0 %499
    %v501 = vsel %vm164, %v497, -inf
    %502 = vmax.xlane.f32.xlu0 %v501
    %v503 = vpop.xlane.xlu0 %502
    %v504 = vsub.f32 %v496, %v500
    %v505 = vsub.f32 %v497, %v503
    %v506 = vmul.f32 %v504, 1.442695
    %v507 = vpow.pop %v506
    %v508 = vmul.f32 %v505, 1.442695
    %v509 = vpow.pop %v508
    %v510 = vsel %vm164, %v507, 0.0
    %511 = vadd.xlane.f32.xlu0 %v510
    %v512 = vpop.xlane.xlu0 %511
    %v513 = vsel %vm164, %v509, 0.0
    %514 = vadd.xlane.f32.xlu0 %v513
    %v515 = vpop.xlane.xlu0 %514
    %v516 = vrcp.pop %v512
    %v517 = vrcp.pop %v515
    %v518 = vmul.f32 %v512, %v516
    %v519 = vmul.f32 %v515, %v517
    %v520 = vsub.f32 2.0, %v518
    %v521 = vsub.f32 2.0, %v519
    %v522 = vmul.f32 %v516, %v520
    %v523 = vmul.f32 %v517, %v521
    %v524 = vmul.f32 %v507, %v522
    %v525 = vmul.f32 %v509, %v523
    %v526 = vpack.c.bf16 %v524, %v524
    %v527 = vpack.c.bf16 %v525, %v525
    %528 = vrot.lane.b32.xlu0 %v292, 56
    %v529 = vpop.permute.xlu0 %528
    %v531 = vsel %vm164, %v526, 0
    %v534 = vsel %vm300, %v529, 0
    %536 = vmatprep.subr.bf16.mxu0 0
    %537 = vmatpush1.bf16.msra.mxu0 %v534
    %538 = vmatprep.subr.bf16.mxu0 0
    %539 = vmatpush1.bf16.msra.mxu0 0
    %540 = vmatprep.subr.bf16.mxu0 0
    %541 = vmatpush1.bf16.msra.mxu0 0
    %542 = vmatprep.subr.bf16.mxu0 0
    %543 = vmatpush1.bf16.msra.mxu0 0
    %544 = vmatprep.subr.bf16.mxu0 0
    %545 = vmatpush1.bf16.msra.mxu0 0
    %546 = vmatprep.subr.bf16.mxu0 0
    %547 = vmatpush1.bf16.msra.mxu0 0
    %548 = vmatprep.subr.bf16.mxu0 0
    %549 = vmatpush1.bf16.msra.mxu0 0
    %550 = vmatprep.subr.bf16.mxu0 0
    %551 = vmatpush1.bf16.msra.mxu0 0
    %552 = vmatprep.subr.bf16.mxu0 0
    %553 = vmatpush1.bf16.msra.mxu0 0
    %554 = vmatprep.subr.bf16.mxu0 0
    %555 = vmatpush1.bf16.msra.mxu0 0
    %556 = vmatprep.subr.bf16.mxu0 0
    %557 = vmatpush1.bf16.msra.mxu0 0
    %558 = vmatprep.subr.bf16.mxu0 0
    %559 = vmatpush1.bf16.msra.mxu0 0
    %560 = vmatprep.subr.bf16.mxu0 0
    %561 = vmatpush1.bf16.msra.mxu0 0
    %562 = vmatprep.subr.bf16.mxu0 0
    %563 = vmatpush1.bf16.msra.mxu0 0
    %564 = vmatprep.subr.bf16.mxu0 0
    %565 = vmatpush1.bf16.msra.mxu0 0
    %566 = vmatprep.subr.bf16.mxu0 0
    %567 = vmatpush1.bf16.msra.mxu0 0
    %568 = vmatprep.mubr.bf16.mxu0 0
    %569 = vmatmul.mubr.bf16.gmra.mrb[0].mxu0 %v531
    %v570 = vpop.f32.mrb[0].mxu0
    %v571 = vadd.f32 0.0, %v570
    %v572 = vpop.f32.mrb[0].mxu0
    %v573 = vpop.f32.mrb[0].mxu0
    %v574 = vpop.f32.mrb[0].mxu0
    %575 = vdwg.mxu0
    %576 = vrot.lane.b32.xlu0 %v293, 56
    %v577 = vpop.permute.xlu0 %576
    %v579 = vsel %vm164, %v527, 0
    %v582 = vsel %vm300, %v577, 0
    %584 = vmatprep.subr.bf16.mxu0 0
    %585 = vmatpush1.bf16.msra.mxu0 %v582
    %586 = vmatprep.subr.bf16.mxu0 0
    %587 = vmatpush1.bf16.msra.mxu0 0
    %588 = vmatprep.subr.bf16.mxu0 0
    %589 = vmatpush1.bf16.msra.mxu0 0
    %590 = vmatprep.subr.bf16.mxu0 0
    %591 = vmatpush1.bf16.msra.mxu0 0
    %592 = vmatprep.subr.bf16.mxu0 0
    %593 = vmatpush1.bf16.msra.mxu0 0
    %594 = vmatprep.subr.bf16.mxu0 0
    %595 = vmatpush1.bf16.msra.mxu0 0
    %596 = vmatprep.subr.bf16.mxu0 0
    %597 = vmatpush1.bf16.msra.mxu0 0
    %598 = vmatprep.subr.bf16.mxu0 0
    %599 = vmatpush1.bf16.msra.mxu0 0
    %600 = vmatprep.subr.bf16.mxu0 0
    %601 = vmatpush1.bf16.msra.mxu0 0
    %602 = vmatprep.subr.bf16.mxu0 0
    %603 = vmatpush1.bf16.msra.mxu0 0
    %604 = vmatprep.subr.bf16.mxu0 0
    %605 = vmatpush1.bf16.msra.mxu0 0
    %606 = vmatprep.subr.bf16.mxu0 0
    %607 = vmatpush1.bf16.msra.mxu0 0
    %608 = vmatprep.subr.bf16.mxu0 0
    %609 = vmatpush1.bf16.msra.mxu0 0
    %610 = vmatprep.subr.bf16.mxu0 0
    %611 = vmatpush1.bf16.msra.mxu0 0
    %612 = vmatprep.subr.bf16.mxu0 0
    %613 = vmatpush1.bf16.msra.mxu0 0
    %614 = vmatprep.subr.bf16.mxu0 0
    %615 = vmatpush1.bf16.msra.mxu0 0
    %616 = vmatprep.mubr.bf16.mxu0 0
    %617 = vmatmul.mubr.bf16.gmra.mrb[0].mxu0 %v579
    %v618 = vpop.f32.mrb[0].mxu0
    %v619 = vadd.f32 0.0, %v618
    %v620 = vpop.f32.mrb[0].mxu0
    %v621 = vpop.f32.mrb[0].mxu0
    %v622 = vpop.f32.mrb[0].mxu0
    %623 = vdwg.mxu0
    %v624 = vpack.c.bf16 %v619, %v571
    %v625 = vpack.c.b16 %v80, %v80
    %626 = vrot.lane.b32.xlu0 %v625, 32
    %v627 = vpop.permute.xlu0 %626
    %v629 = vsel %vm164, %v624, 0
    %v632 = vsel %vm300, %v627, 0
    %634 = vmatprep.subr.bf16.mxu0 0
    %635 = vmatpush1.bf16.msra.mxu0 %v632
    %636 = vmatprep.subr.bf16.mxu0 0
    %637 = vmatpush1.bf16.msra.mxu0 0
    %638 = vmatprep.subr.bf16.mxu0 0
    %639 = vmatpush1.bf16.msra.mxu0 0
    %640 = vmatprep.subr.bf16.mxu0 0
    %641 = vmatpush1.bf16.msra.mxu0 0
    %642 = vmatprep.subr.bf16.mxu0 0
    %643 = vmatpush1.bf16.msra.mxu0 0
    %644 = vmatprep.subr.bf16.mxu0 0
    %645 = vmatpush1.bf16.msra.mxu0 0
    %646 = vmatprep.subr.bf16.mxu0 0
    %647 = vmatpush1.bf16.msra.mxu0 0
    %648 = vmatprep.subr.bf16.mxu0 0
    %649 = vmatpush1.bf16.msra.mxu0 0
    %650 = vmatprep.subr.bf16.mxu0 0
    %651 = vmatpush1.bf16.msra.mxu0 0
    %652 = vmatprep.subr.bf16.mxu0 0
    %653 = vmatpush1.bf16.msra.mxu0 0
    %654 = vmatprep.subr.bf16.mxu0 0
    %655 = vmatpush1.bf16.msra.mxu0 0
    %656 = vmatprep.subr.bf16.mxu0 0
    %657 = vmatpush1.bf16.msra.mxu0 0
    %658 = vmatprep.subr.bf16.mxu0 0
    %659 = vmatpush1.bf16.msra.mxu0 0
    %660 = vmatprep.subr.bf16.mxu0 0
    %661 = vmatpush1.bf16.msra.mxu0 0
    %662 = vmatprep.subr.bf16.mxu0 0
    %663 = vmatpush1.bf16.msra.mxu0 0
    %664 = vmatprep.subr.bf16.mxu0 0
    %665 = vmatpush1.bf16.msra.mxu0 0
    %666 = vmatprep.mubr.bf16.mxu0 0
    %667 = vmatmul.mubr.bf16.gmra.mrb[0].mxu0 %v629
    %v668 = vpop.f32.mrb[0].mxu0
    %v669 = vadd.f32 0.0, %v668
    %v670 = vpop.f32.mrb[0].mxu0
    %v671 = vpop.f32.mrb[0].mxu0
    %v672 = vadd.f32 0.0, %v671
    %v673 = vpop.f32.mrb[0].mxu0
    %674 = vdwg.mxu0
    %v675 = vpack.c.b16 %v79, %v79
    %676 = vrot.lane.b32.xlu0 %v675, 32
    %v677 = vpop.permute.xlu0 %676
    %v679 = vsel %vm164, %v393, 0
    %v682 = vsel %vm300, %v677, 0
    %684 = vmatprep.subr.bf16.mxu0 0
    %685 = vmatpush1.bf16.msra.mxu0 %v682
    %686 = vmatprep.subr.bf16.mxu0 0
    %687 = vmatpush1.bf16.msra.mxu0 0
    %688 = vmatprep.subr.bf16.mxu0 0
    %689 = vmatpush1.bf16.msra.mxu0 0
    %690 = vmatprep.subr.bf16.mxu0 0
    %691 = vmatpush1.bf16.msra.mxu0 0
    %692 = vmatprep.subr.bf16.mxu0 0
    %693 = vmatpush1.bf16.msra.mxu0 0
    %694 = vmatprep.subr.bf16.mxu0 0
    %695 = vmatpush1.bf16.msra.mxu0 0
    %696 = vmatprep.subr.bf16.mxu0 0
    %697 = vmatpush1.bf16.msra.mxu0 0
    %698 = vmatprep.subr.bf16.mxu0 0
    %699 = vmatpush1.bf16.msra.mxu0 0
    %700 = vmatprep.subr.bf16.mxu0 0
    %701 = vmatpush1.bf16.msra.mxu0 0
    %702 = vmatprep.subr.bf16.mxu0 0
    %703 = vmatpush1.bf16.msra.mxu0 0
    %704 = vmatprep.subr.bf16.mxu0 0
    %705 = vmatpush1.bf16.msra.mxu0 0
    %706 = vmatprep.subr.bf16.mxu0 0
    %707 = vmatpush1.bf16.msra.mxu0 0
    %708 = vmatprep.subr.bf16.mxu0 0
    %709 = vmatpush1.bf16.msra.mxu0 0
    %710 = vmatprep.subr.bf16.mxu0 0
    %711 = vmatpush1.bf16.msra.mxu0 0
    %712 = vmatprep.subr.bf16.mxu0 0
    %713 = vmatpush1.bf16.msra.mxu0 0
    %714 = vmatprep.subr.bf16.mxu0 0
    %715 = vmatpush1.bf16.msra.mxu0 0
    %716 = vmatprep.mubr.bf16.mxu0 0
    %717 = vmatmul.mubr.bf16.gmra.mrb[0].mxu0 %v679
    %v718 = vpop.f32.mrb[0].mxu0
    %v719 = vadd.f32 %v669, %v718
    %v720 = vpop.f32.mrb[0].mxu0
    %v721 = vpop.f32.mrb[0].mxu0
    %v722 = vadd.f32 %v672, %v721
    %v723 = vpop.f32.mrb[0].mxu0
    %724 = vdwg.mxu0
    %725 = vrot.lane.b32.xlu0 %v157, 112
    %v726 = vpop.permute.xlu0 %725
    %727 = vrot.lane.b32.xlu0 %v159, 80
    %v728 = vpop.permute.xlu0 %727
    %v730 = vsel %vm164, %v726, 0
    %v733 = vsel %vm164, %v728, 0
    %735 = vmatprep.subr.bf16.mxu0 0
    %736 = vmatpush1.bf16.xpose.msra.mxu0 %v733
    %737 = vmatprep.subr.bf16.mxu0 0
    %738 = vmatpush1.bf16.xpose.msra.mxu0 0
    %739 = vmatprep.subr.bf16.mxu0 0
    %740 = vmatpush1.bf16.xpose.msra.mxu0 0
    %741 = vmatprep.subr.bf16.mxu0 0
    %742 = vmatpush1.bf16.xpose.msra.mxu0 0
    %743 = vmatprep.subr.bf16.mxu0 0
    %744 = vmatpush1.bf16.xpose.msra.mxu0 0
    %745 = vmatprep.subr.bf16.mxu0 0
    %746 = vmatpush1.bf16.xpose.msra.mxu0 0
    %747 = vmatprep.subr.bf16.mxu0 0
    %748 = vmatpush1.bf16.xpose.msra.mxu0 0
    %749 = vmatprep.subr.bf16.mxu0 0
    %750 = vmatpush1.bf16.xpose.msra.mxu0 0
    %751 = vmatprep.subr.bf16.mxu0 0
    %752 = vmatpush1.bf16.xpose.msra.mxu0 0
    %753 = vmatprep.subr.bf16.mxu0 0
    %754 = vmatpush1.bf16.xpose.msra.mxu0 0
    %755 = vmatprep.subr.bf16.mxu0 0
    %756 = vmatpush1.bf16.xpose.msra.mxu0 0
    %757 = vmatprep.subr.bf16.mxu0 0
    %758 = vmatpush1.bf16.xpose.msra.mxu0 0
    %759 = vmatprep.subr.bf16.mxu0 0
    %760 = vmatpush1.bf16.xpose.msra.mxu0 0
    %761 = vmatprep.subr.bf16.mxu0 0
    %762 = vmatpush1.bf16.xpose.msra.mxu0 0
    %763 = vmatprep.subr.bf16.mxu0 0
    %764 = vmatpush1.bf16.xpose.msra.mxu0 0
    %765 = vmatprep.subr.bf16.mxu0 0
    %766 = vmatpush1.bf16.xpose.msra.mxu0 0
    %767 = vmatprep.mubr.bf16.mxu0 0
    %768 = vmatmul.mubr.bf16.gmra.mrb[0].mxu0 %v730
    %v769 = vpop.f32.mrb[0].mxu0
    %v770 = vadd.f32 0.0, %v769
    %v771 = vpop.f32.mrb[0].mxu0
    %v772 = vpop.f32.mrb[0].mxu0
    %v773 = vpop.f32.mrb[0].mxu0
    %774 = vdwg.mxu0
    %775 = vrot.lane.b32.xlu0 %v158, 112
    %v776 = vpop.permute.xlu0 %775
    %777 = vrot.lane.b32.xlu0 %v160, 80
    %v778 = vpop.permute.xlu0 %777
    %v780 = vsel %vm164, %v776, 0
    %v783 = vsel %vm164, %v778, 0
    %785 = vmatprep.subr.bf16.mxu0 0
    %786 = vmatpush1.bf16.xpose.msra.mxu0 %v783
    %787 = vmatprep.subr.bf16.mxu0 0
    %788 = vmatpush1.bf16.xpose.msra.mxu0 0
    %789 = vmatprep.subr.bf16.mxu0 0
    %790 = vmatpush1.bf16.xpose.msra.mxu0 0
    %791 = vmatprep.subr.bf16.mxu0 0
    %792 = vmatpush1.bf16.xpose.msra.mxu0 0
    %793 = vmatprep.subr.bf16.mxu0 0
    %794 = vmatpush1.bf16.xpose.msra.mxu0 0
    %795 = vmatprep.subr.bf16.mxu0 0
    %796 = vmatpush1.bf16.xpose.msra.mxu0 0
    %797 = vmatprep.subr.bf16.mxu0 0
    %798 = vmatpush1.bf16.xpose.msra.mxu0 0
    %799 = vmatprep.subr.bf16.mxu0 0
    %800 = vmatpush1.bf16.xpose.msra.mxu0 0
    %801 = vmatprep.subr.bf16.mxu0 0
    %802 = vmatpush1.bf16.xpose.msra.mxu0 0
    %803 = vmatprep.subr.bf16.mxu0 0
    %804 = vmatpush1.bf16.xpose.msra.mxu0 0
    %805 = vmatprep.subr.bf16.mxu0 0
    %806 = vmatpush1.bf16.xpose.msra.mxu0 0
    %807 = vmatprep.subr.bf16.mxu0 0
    %808 = vmatpush1.bf16.xpose.msra.mxu0 0
    %809 = vmatprep.subr.bf16.mxu0 0
    %810 = vmatpush1.bf16.xpose.msra.mxu0 0
    %811 = vmatprep.subr.bf16.mxu0 0
    %812 = vmatpush1.bf16.xpose.msra.mxu0 0
    %813 = vmatprep.subr.bf16.mxu0 0
    %814 = vmatpush1.bf16.xpose.msra.mxu0 0
    %815 = vmatprep.subr.bf16.mxu0 0
    %816 = vmatpush1.bf16.xpose.msra.mxu0 0
    %817 = vmatprep.mubr.bf16.mxu0 0
    %818 = vmatmul.mubr.bf16.gmra.mrb[0].mxu0 %v780
    %v819 = vpop.f32.mrb[0].mxu0
    %v820 = vadd.f32 0.0, %v819
    %v821 = vpop.f32.mrb[0].mxu0
    %v822 = vpop.f32.mrb[0].mxu0
    %v823 = vpop.f32.mrb[0].mxu0
    %824 = vdwg.mxu0
    %v825 = vmul.f32 %v770, 0.35355338
    %v826 = vmul.f32 %v820, 0.35355338
    %v827 = vsel %vm164, %v825, -inf
    %828 = vmax.xlane.f32.xlu0 %v827
    %v829 = vpop.xlane.xlu0 %828
    %v830 = vsel %vm164, %v826, -inf
    %831 = vmax.xlane.f32.xlu0 %v830
    %v832 = vpop.xlane.xlu0 %831
    %v833 = vsub.f32 %v825, %v829
    %v834 = vsub.f32 %v826, %v832
    %v835 = vmul.f32 %v833, 1.442695
    %v836 = vpow.pop %v835
    %v837 = vmul.f32 %v834, 1.442695
    %v838 = vpow.pop %v837
    %v839 = vsel %vm164, %v836, 0.0
    %840 = vadd.xlane.f32.xlu0 %v839
    %v841 = vpop.xlane.xlu0 %840
    %v842 = vsel %vm164, %v838, 0.0
    %843 = vadd.xlane.f32.xlu0 %v842
    %v844 = vpop.xlane.xlu0 %843
    %v845 = vrcp.pop %v841
    %v846 = vrcp.pop %v844
    %v847 = vmul.f32 %v841, %v845
    %v848 = vmul.f32 %v844, %v846
    %v849 = vsub.f32 2.0, %v847
    %v850 = vsub.f32 2.0, %v848
    %v851 = vmul.f32 %v845, %v849
    %v852 = vmul.f32 %v846, %v850
    %v853 = vmul.f32 %v836, %v851
    %v854 = vmul.f32 %v838, %v852
    %v855 = vpack.c.bf16 %v853, %v853
    %v856 = vpack.c.bf16 %v854, %v854
    %857 = vrot.lane.b32.xlu0 %v292, 48
    %v858 = vpop.permute.xlu0 %857
    %v860 = vsel %vm164, %v855, 0
    %v863 = vsel %vm300, %v858, 0
    %865 = vmatprep.subr.bf16.mxu0 0
    %866 = vmatpush1.bf16.msra.mxu0 %v863
    %867 = vmatprep.subr.bf16.mxu0 0
    %868 = vmatpush1.bf16.msra.mxu0 0
    %869 = vmatprep.subr.bf16.mxu0 0
    %870 = vmatpush1.bf16.msra.mxu0 0
    %871 = vmatprep.subr.bf16.mxu0 0
    %872 = vmatpush1.bf16.msra.mxu0 0
    %873 = vmatprep.subr.bf16.mxu0 0
    %874 = vmatpush1.bf16.msra.mxu0 0
    %875 = vmatprep.subr.bf16.mxu0 0
    %876 = vmatpush1.bf16.msra.mxu0 0
    %877 = vmatprep.subr.bf16.mxu0 0
    %878 = vmatpush1.bf16.msra.mxu0 0
    %879 = vmatprep.subr.bf16.mxu0 0
    %880 = vmatpush1.bf16.msra.mxu0 0
    %881 = vmatprep.subr.bf16.mxu0 0
    %882 = vmatpush1.bf16.msra.mxu0 0
    %883 = vmatprep.subr.bf16.mxu0 0
    %884 = vmatpush1.bf16.msra.mxu0 0
    %885 = vmatprep.subr.bf16.mxu0 0
    %886 = vmatpush1.bf16.msra.mxu0 0
    %887 = vmatprep.subr.bf16.mxu0 0
    %888 = vmatpush1.bf16.msra.mxu0 0
    %889 = vmatprep.subr.bf16.mxu0 0
    %890 = vmatpush1.bf16.msra.mxu0 0
    %891 = vmatprep.subr.bf16.mxu0 0
    %892 = vmatpush1.bf16.msra.mxu0 0
    %893 = vmatprep.subr.bf16.mxu0 0
    %894 = vmatpush1.bf16.msra.mxu0 0
    %895 = vmatprep.subr.bf16.mxu0 0
    %896 = vmatpush1.bf16.msra.mxu0 0
    %897 = vmatprep.mubr.bf16.mxu0 0
    %898 = vmatmul.mubr.bf16.gmra.mrb[0].mxu0 %v860
    %v899 = vpop.f32.mrb[0].mxu0
    %v900 = vadd.f32 0.0, %v899
    %v901 = vpop.f32.mrb[0].mxu0
    %v902 = vpop.f32.mrb[0].mxu0
    %v903 = vpop.f32.mrb[0].mxu0
    %904 = vdwg.mxu0
    %905 = vrot.lane.b32.xlu0 %v293, 48
    %v906 = vpop.permute.xlu0 %905
    %v908 = vsel %vm164, %v856, 0
    %v911 = vsel %vm300, %v906, 0
    %913 = vmatprep.subr.bf16.mxu0 0
    %914 = vmatpush1.bf16.msra.mxu0 %v911
    %915 = vmatprep.subr.bf16.mxu0 0
    %916 = vmatpush1.bf16.msra.mxu0 0
    %917 = vmatprep.subr.bf16.mxu0 0
    %918 = vmatpush1.bf16.msra.mxu0 0
    %919 = vmatprep.subr.bf16.mxu0 0
    %920 = vmatpush1.bf16.msra.mxu0 0
    %921 = vmatprep.subr.bf16.mxu0 0
    %922 = vmatpush1.bf16.msra.mxu0 0
    %923 = vmatprep.subr.bf16.mxu0 0
    %924 = vmatpush1.bf16.msra.mxu0 0
    %925 = vmatprep.subr.bf16.mxu0 0
    %926 = vmatpush1.bf16.msra.mxu0 0
    %927 = vmatprep.subr.bf16.mxu0 0
    %928 = vmatpush1.bf16.msra.mxu0 0
    %929 = vmatprep.subr.bf16.mxu0 0
    %930 = vmatpush1.bf16.msra.mxu0 0
    %931 = vmatprep.subr.bf16.mxu0 0
    %932 = vmatpush1.bf16.msra.mxu0 0
    %933 = vmatprep.subr.bf16.mxu0 0
    %934 = vmatpush1.bf16.msra.mxu0 0
    %935 = vmatprep.subr.bf16.mxu0 0
    %936 = vmatpush1.bf16.msra.mxu0 0
    %937 = vmatprep.subr.bf16.mxu0 0
    %938 = vmatpush1.bf16.msra.mxu0 0
    %939 = vmatprep.subr.bf16.mxu0 0
    %940 = vmatpush1.bf16.msra.mxu0 0
    %941 = vmatprep.subr.bf16.mxu0 0
    %942 = vmatpush1.bf16.msra.mxu0 0
    %943 = vmatprep.subr.bf16.mxu0 0
    %944 = vmatpush1.bf16.msra.mxu0 0
    %945 = vmatprep.mubr.bf16.mxu0 0
    %946 = vmatmul.mubr.bf16.gmra.mrb[0].mxu0 %v908
    %v947 = vpop.f32.mrb[0].mxu0
    %v948 = vadd.f32 0.0, %v947
    %v949 = vpop.f32.mrb[0].mxu0
    %v950 = vpop.f32.mrb[0].mxu0
    %v951 = vpop.f32.mrb[0].mxu0
    %952 = vdwg.mxu0
    %v953 = vpack.c.bf16 %v948, %v900
    %v954 = vpack.c.b16 %v81, %v81
    %955 = vrot.lane.b32.xlu0 %v954, 32
    %v956 = vpop.permute.xlu0 %955
    %v958 = vsel %vm164, %v953, 0
    %v961 = vsel %vm300, %v956, 0
    %963 = vmatprep.subr.bf16.mxu0 0
    %964 = vmatpush1.bf16.msra.mxu0 %v961
    %965 = vmatprep.subr.bf16.mxu0 0
    %966 = vmatpush1.bf16.msra.mxu0 0
    %967 = vmatprep.subr.bf16.mxu0 0
    %968 = vmatpush1.bf16.msra.mxu0 0
    %969 = vmatprep.subr.bf16.mxu0 0
    %970 = vmatpush1.bf16.msra.mxu0 0
    %971 = vmatprep.subr.bf16.mxu0 0
    %972 = vmatpush1.bf16.msra.mxu0 0
    %973 = vmatprep.subr.bf16.mxu0 0
    %974 = vmatpush1.bf16.msra.mxu0 0
    %975 = vmatprep.subr.bf16.mxu0 0
    %976 = vmatpush1.bf16.msra.mxu0 0
    %977 = vmatprep.subr.bf16.mxu0 0
    %978 = vmatpush1.bf16.msra.mxu0 0
    %979 = vmatprep.subr.bf16.mxu0 0
    %980 = vmatpush1.bf16.msra.mxu0 0
    %981 = vmatprep.subr.bf16.mxu0 0
    %982 = vmatpush1.bf16.msra.mxu0 0
    %983 = vmatprep.subr.bf16.mxu0 0
    %984 = vmatpush1.bf16.msra.mxu0 0
    %985 = vmatprep.subr.bf16.mxu0 0
    %986 = vmatpush1.bf16.msra.mxu0 0
    %987 = vmatprep.subr.bf16.mxu0 0
    %988 = vmatpush1.bf16.msra.mxu0 0
    %989 = vmatprep.subr.bf16.mxu0 0
    %990 = vmatpush1.bf16.msra.mxu0 0
    %991 = vmatprep.subr.bf16.mxu0 0
    %992 = vmatpush1.bf16.msra.mxu0 0
    %993 = vmatprep.subr.bf16.mxu0 0
    %994 = vmatpush1.bf16.msra.mxu0 0
    %995 = vmatprep.mubr.bf16.mxu0 0
    %996 = vmatmul.mubr.bf16.gmra.mrb[0].mxu0 %v958
    %v997 = vpop.f32.mrb[0].mxu0
    %v998 = vadd.f32 0.0, %v997
    %v999 = vpop.f32.mrb[0].mxu0
    %v1000 = vpop.f32.mrb[0].mxu0
    %v1001 = vadd.f32 0.0, %v1000
    %v1002 = vpop.f32.mrb[0].mxu0
    %1003 = vdwg.mxu0
    %v1004 = vadd.f32 %v719, %v998
    %v1005 = vadd.f32 %v722, %v1001
    %1006 = vrot.lane.b32.xlu0 %v157, 104
    %v1007 = vpop.permute.xlu0 %1006
    %1008 = vrot.lane.b32.xlu0 %v159, 72
    %v1009 = vpop.permute.xlu0 %1008
    %v1011 = vsel %vm164, %v1007, 0
    %v1014 = vsel %vm164, %v1009, 0
    %1016 = vmatprep.subr.bf16.mxu0 0
    %1017 = vmatpush1.bf16.xpose.msra.mxu0 %v1014
    %1018 = vmatprep.subr.bf16.mxu0 0
    %1019 = vmatpush1.bf16.xpose.msra.mxu0 0
    %1020 = vmatprep.subr.bf16.mxu0 0
    %1021 = vmatpush1.bf16.xpose.msra.mxu0 0
    %1022 = vmatprep.subr.bf16.mxu0 0
    %1023 = vmatpush1.bf16.xpose.msra.mxu0 0
    %1024 = vmatprep.subr.bf16.mxu0 0
    %1025 = vmatpush1.bf16.xpose.msra.mxu0 0
    %1026 = vmatprep.subr.bf16.mxu0 0
    %1027 = vmatpush1.bf16.xpose.msra.mxu0 0
    %1028 = vmatprep.subr.bf16.mxu0 0
    %1029 = vmatpush1.bf16.xpose.msra.mxu0 0
    %1030 = vmatprep.subr.bf16.mxu0 0
    %1031 = vmatpush1.bf16.xpose.msra.mxu0 0
    %1032 = vmatprep.subr.bf16.mxu0 0
    %1033 = vmatpush1.bf16.xpose.msra.mxu0 0
    %1034 = vmatprep.subr.bf16.mxu0 0
    %1035 = vmatpush1.bf16.xpose.msra.mxu0 0
    %1036 = vmatprep.subr.bf16.mxu0 0
    %1037 = vmatpush1.bf16.xpose.msra.mxu0 0
    %1038 = vmatprep.subr.bf16.mxu0 0
    %1039 = vmatpush1.bf16.xpose.msra.mxu0 0
    %1040 = vmatprep.subr.bf16.mxu0 0
    %1041 = vmatpush1.bf16.xpose.msra.mxu0 0
    %1042 = vmatprep.subr.bf16.mxu0 0
    %1043 = vmatpush1.bf16.xpose.msra.mxu0 0
    %1044 = vmatprep.subr.bf16.mxu0 0
    %1045 = vmatpush1.bf16.xpose.msra.mxu0 0
    %1046 = vmatprep.subr.bf16.mxu0 0
    %1047 = vmatpush1.bf16.xpose.msra.mxu0 0
    %1048 = vmatprep.mubr.bf16.mxu0 0
    %1049 = vmatmul.mubr.bf16.gmra.mrb[0].mxu0 %v1011
    %v1050 = vpop.f32.mrb[0].mxu0
    %v1051 = vadd.f32 0.0, %v1050
    %v1052 = vpop.f32.mrb[0].mxu0
    %v1053 = vpop.f32.mrb[0].mxu0
    %v1054 = vpop.f32.mrb[0].mxu0
    %1055 = vdwg.mxu0
    %1056 = vrot.lane.b32.xlu0 %v158, 104
    %v1057 = vpop.permute.xlu0 %1056
    %1058 = vrot.lane.b32.xlu0 %v160, 72
    %v1059 = vpop.permute.xlu0 %1058
    %v1061 = vsel %vm164, %v1057, 0
    %v1064 = vsel %vm164, %v1059, 0
    %1066 = vmatprep.subr.bf16.mxu0 0
    %1067 = vmatpush1.bf16.xpose.msra.mxu0 %v1064
    %1068 = vmatprep.subr.bf16.mxu0 0
    %1069 = vmatpush1.bf16.xpose.msra.mxu0 0
    %1070 = vmatprep.subr.bf16.mxu0 0
    %1071 = vmatpush1.bf16.xpose.msra.mxu0 0
    %1072 = vmatprep.subr.bf16.mxu0 0
    %1073 = vmatpush1.bf16.xpose.msra.mxu0 0
    %1074 = vmatprep.subr.bf16.mxu0 0
    %1075 = vmatpush1.bf16.xpose.msra.mxu0 0
    %1076 = vmatprep.subr.bf16.mxu0 0
    %1077 = vmatpush1.bf16.xpose.msra.mxu0 0
    %1078 = vmatprep.subr.bf16.mxu0 0
    %1079 = vmatpush1.bf16.xpose.msra.mxu0 0
    %1080 = vmatprep.subr.bf16.mxu0 0
    %1081 = vmatpush1.bf16.xpose.msra.mxu0 0
    %1082 = vmatprep.subr.bf16.mxu0 0
    %1083 = vmatpush1.bf16.xpose.msra.mxu0 0
    %1084 = vmatprep.subr.bf16.mxu0 0
    %1085 = vmatpush1.bf16.xpose.msra.mxu0 0
    %1086 = vmatprep.subr.bf16.mxu0 0
    %1087 = vmatpush1.bf16.xpose.msra.mxu0 0
    %1088 = vmatprep.subr.bf16.mxu0 0
    %1089 = vmatpush1.bf16.xpose.msra.mxu0 0
    %1090 = vmatprep.subr.bf16.mxu0 0
    %1091 = vmatpush1.bf16.xpose.msra.mxu0 0
    %1092 = vmatprep.subr.bf16.mxu0 0
    %1093 = vmatpush1.bf16.xpose.msra.mxu0 0
    %1094 = vmatprep.subr.bf16.mxu0 0
    %1095 = vmatpush1.bf16.xpose.msra.mxu0 0
    %1096 = vmatprep.subr.bf16.mxu0 0
    %1097 = vmatpush1.bf16.xpose.msra.mxu0 0
    %1098 = vmatprep.mubr.bf16.mxu0 0
    %1099 = vmatmul.mubr.bf16.gmra.mrb[0].mxu0 %v1061
    %v1100 = vpop.f32.mrb[0].mxu0
    %v1101 = vadd.f32 0.0, %v1100
    %v1102 = vpop.f32.mrb[0].mxu0
    %v1103 = vpop.f32.mrb[0].mxu0
    %v1104 = vpop.f32.mrb[0].mxu0
    %1105 = vdwg.mxu0
    %v1106 = vmul.f32 %v1051, 0.35355338
    %v1107 = vmul.f32 %v1101, 0.35355338
    %v1108 = vsel %vm164, %v1106, -inf
    %1109 = vmax.xlane.f32.xlu0 %v1108
    %v1110 = vpop.xlane.xlu0 %1109
    %v1111 = vsel %vm164, %v1107, -inf
    %1112 = vmax.xlane.f32.xlu0 %v1111
    %v1113 = vpop.xlane.xlu0 %1112
    %v1114 = vsub.f32 %v1106, %v1110
    %v1115 = vsub.f32 %v1107, %v1113
    %v1116 = vmul.f32 %v1114, 1.442695
    %v1117 = vpow.pop %v1116
    %v1118 = vmul.f32 %v1115, 1.442695
    %v1119 = vpow.pop %v1118
    %v1120 = vsel %vm164, %v1117, 0.0
    %1121 = vadd.xlane.f32.xlu0 %v1120
    %v1122 = vpop.xlane.xlu0 %1121
    %v1123 = vsel %vm164, %v1119, 0.0
    %1124 = vadd.xlane.f32.xlu0 %v1123
    %v1125 = vpop.xlane.xlu0 %1124
    %v1126 = vrcp.pop %v1122
    %v1127 = vrcp.pop %v1125
    %v1128 = vmul.f32 %v1122, %v1126
    %v1129 = vmul.f32 %v1125, %v1127
    %v1130 = vsub.f32 2.0, %v1128
    %v1131 = vsub.f32 2.0, %v1129
    %v1132 = vmul.f32 %v1126, %v1130
    %v1133 = vmul.f32 %v1127, %v1131
    %v1134 = vmul.f32 %v1117, %v1132
    %v1135 = vmul.f32 %v1119, %v1133
    %v1136 = vpack.c.bf16 %v1134, %v1134
    %v1137 = vpack.c.bf16 %v1135, %v1135
    %1138 = vrot.lane.b32.xlu0 %v292, 40
    %v1139 = vpop.permute.xlu0 %1138
    %v1141 = vsel %vm164, %v1136, 0
    %v1144 = vsel %vm300, %v1139, 0
    %1146 = vmatprep.subr.bf16.mxu0 0
    %1147 = vmatpush1.bf16.msra.mxu0 %v1144
    %1148 = vmatprep.subr.bf16.mxu0 0
    %1149 = vmatpush1.bf16.msra.mxu0 0
    %1150 = vmatprep.subr.bf16.mxu0 0
    %1151 = vmatpush1.bf16.msra.mxu0 0
    %1152 = vmatprep.subr.bf16.mxu0 0
    %1153 = vmatpush1.bf16.msra.mxu0 0
    %1154 = vmatprep.subr.bf16.mxu0 0
    %1155 = vmatpush1.bf16.msra.mxu0 0
    %1156 = vmatprep.subr.bf16.mxu0 0
    %1157 = vmatpush1.bf16.msra.mxu0 0
    %1158 = vmatprep.subr.bf16.mxu0 0
    %1159 = vmatpush1.bf16.msra.mxu0 0
    %1160 = vmatprep.subr.bf16.mxu0 0
    %1161 = vmatpush1.bf16.msra.mxu0 0
    %1162 = vmatprep.subr.bf16.mxu0 0
    %1163 = vmatpush1.bf16.msra.mxu0 0
    %1164 = vmatprep.subr.bf16.mxu0 0
    %1165 = vmatpush1.bf16.msra.mxu0 0
    %1166 = vmatprep.subr.bf16.mxu0 0
    %1167 = vmatpush1.bf16.msra.mxu0 0
    %1168 = vmatprep.subr.bf16.mxu0 0
    %1169 = vmatpush1.bf16.msra.mxu0 0
    %1170 = vmatprep.subr.bf16.mxu0 0
    %1171 = vmatpush1.bf16.msra.mxu0 0
    %1172 = vmatprep.subr.bf16.mxu0 0
    %1173 = vmatpush1.bf16.msra.mxu0 0
    %1174 = vmatprep.subr.bf16.mxu0 0
    %1175 = vmatpush1.bf16.msra.mxu0 0
    %1176 = vmatprep.subr.bf16.mxu0 0
    %1177 = vmatpush1.bf16.msra.mxu0 0
    %1178 = vmatprep.mubr.bf16.mxu0 0
    %1179 = vmatmul.mubr.bf16.gmra.mrb[0].mxu0 %v1141
    %v1180 = vpop.f32.mrb[0].mxu0
    %v1181 = vadd.f32 0.0, %v1180
    %v1182 = vpop.f32.mrb[0].mxu0
    %v1183 = vpop.f32.mrb[0].mxu0
    %v1184 = vpop.f32.mrb[0].mxu0
    %1185 = vdwg.mxu0
    %1186 = vrot.lane.b32.xlu0 %v293, 40
    %v1187 = vpop.permute.xlu0 %1186
    %v1189 = vsel %vm164, %v1137, 0
    %v1192 = vsel %vm300, %v1187, 0
    %1194 = vmatprep.subr.bf16.mxu0 0
    %1195 = vmatpush1.bf16.msra.mxu0 %v1192
    %1196 = vmatprep.subr.bf16.mxu0 0
    %1197 = vmatpush1.bf16.msra.mxu0 0
    %1198 = vmatprep.subr.bf16.mxu0 0
    %1199 = vmatpush1.bf16.msra.mxu0 0
    %1200 = vmatprep.subr.bf16.mxu0 0
    %1201 = vmatpush1.bf16.msra.mxu0 0
    %1202 = vmatprep.subr.bf16.mxu0 0
    %1203 = vmatpush1.bf16.msra.mxu0 0
    %1204 = vmatprep.subr.bf16.mxu0 0
    %1205 = vmatpush1.bf16.msra.mxu0 0
    %1206 = vmatprep.subr.bf16.mxu0 0
    %1207 = vmatpush1.bf16.msra.mxu0 0
    %1208 = vmatprep.subr.bf16.mxu0 0
    %1209 = vmatpush1.bf16.msra.mxu0 0
    %1210 = vmatprep.subr.bf16.mxu0 0
    %1211 = vmatpush1.bf16.msra.mxu0 0
    %1212 = vmatprep.subr.bf16.mxu0 0
    %1213 = vmatpush1.bf16.msra.mxu0 0
    %1214 = vmatprep.subr.bf16.mxu0 0
    %1215 = vmatpush1.bf16.msra.mxu0 0
    %1216 = vmatprep.subr.bf16.mxu0 0
    %1217 = vmatpush1.bf16.msra.mxu0 0
    %1218 = vmatprep.subr.bf16.mxu0 0
    %1219 = vmatpush1.bf16.msra.mxu0 0
    %1220 = vmatprep.subr.bf16.mxu0 0
    %1221 = vmatpush1.bf16.msra.mxu0 0
    %1222 = vmatprep.subr.bf16.mxu0 0
    %1223 = vmatpush1.bf16.msra.mxu0 0
    %1224 = vmatprep.subr.bf16.mxu0 0
    %1225 = vmatpush1.bf16.msra.mxu0 0
    %1226 = vmatprep.mubr.bf16.mxu0 0
    %1227 = vmatmul.mubr.bf16.gmra.mrb[0].mxu0 %v1189
    %v1228 = vpop.f32.mrb[0].mxu0
    %v1229 = vadd.f32 0.0, %v1228
    %v1230 = vpop.f32.mrb[0].mxu0
    %v1231 = vpop.f32.mrb[0].mxu0
    %v1232 = vpop.f32.mrb[0].mxu0
    %1233 = vdwg.mxu0
    %v1234 = vpack.c.bf16 %v1229, %v1181
    %v1235 = vpack.c.b16 %v82, %v82
    %1236 = vrot.lane.b32.xlu0 %v1235, 32
    %v1237 = vpop.permute.xlu0 %1236
    %v1239 = vsel %vm164, %v1234, 0
    %v1242 = vsel %vm300, %v1237, 0
    %1244 = vmatprep.subr.bf16.mxu0 0
    %1245 = vmatpush1.bf16.msra.mxu0 %v1242
    %1246 = vmatprep.subr.bf16.mxu0 0
    %1247 = vmatpush1.bf16.msra.mxu0 0
    %1248 = vmatprep.subr.bf16.mxu0 0
    %1249 = vmatpush1.bf16.msra.mxu0 0
    %1250 = vmatprep.subr.bf16.mxu0 0
    %1251 = vmatpush1.bf16.msra.mxu0 0
    %1252 = vmatprep.subr.bf16.mxu0 0
    %1253 = vmatpush1.bf16.msra.mxu0 0
    %1254 = vmatprep.subr.bf16.mxu0 0
    %1255 = vmatpush1.bf16.msra.mxu0 0
    %1256 = vmatprep.subr.bf16.mxu0 0
    %1257 = vmatpush1.bf16.msra.mxu0 0
    %1258 = vmatprep.subr.bf16.mxu0 0
    %1259 = vmatpush1.bf16.msra.mxu0 0
    %1260 = vmatprep.subr.bf16.mxu0 0
    %1261 = vmatpush1.bf16.msra.mxu0 0
    %1262 = vmatprep.subr.bf16.mxu0 0
    %1263 = vmatpush1.bf16.msra.mxu0 0
    %1264 = vmatprep.subr.bf16.mxu0 0
    %1265 = vmatpush1.bf16.msra.mxu0 0
    %1266 = vmatprep.subr.bf16.mxu0 0
    %1267 = vmatpush1.bf16.msra.mxu0 0
    %1268 = vmatprep.subr.bf16.mxu0 0
    %1269 = vmatpush1.bf16.msra.mxu0 0
    %1270 = vmatprep.subr.bf16.mxu0 0
    %1271 = vmatpush1.bf16.msra.mxu0 0
    %1272 = vmatprep.subr.bf16.mxu0 0
    %1273 = vmatpush1.bf16.msra.mxu0 0
    %1274 = vmatprep.subr.bf16.mxu0 0
    %1275 = vmatpush1.bf16.msra.mxu0 0
    %1276 = vmatprep.mubr.bf16.mxu0 0
    %1277 = vmatmul.mubr.bf16.gmra.mrb[0].mxu0 %v1239
    %v1278 = vpop.f32.mrb[0].mxu0
    %v1279 = vadd.f32 0.0, %v1278
    %v1280 = vpop.f32.mrb[0].mxu0
    %v1281 = vpop.f32.mrb[0].mxu0
    %v1282 = vadd.f32 0.0, %v1281
    %v1283 = vpop.f32.mrb[0].mxu0
    %1284 = vdwg.mxu0
    %v1285 = vadd.f32 %v1004, %v1279
    %v1286 = vadd.f32 %v1005, %v1282
    %v1287 = vlaneseq
    %v1288 = vshrl.u32 %v1287, 7
    %v1289 = vsub.s32 0, %v1288
    %v1290 = vrot.slane %v65, %v1289
    %v1291 = vadd.f32 %v1285, %v1290
    %v1292 = vadd.f32 %v1286, %v1290
    %v1293 = vadd.f32 %v47, %v1291
    %v1294 = vadd.f32 %v48, %v1292
    %v1295 = vsel %vm72, %v1293, 0.0
    %1296 = vadd.xlane.f32.xlu0 %v1295
    %v1297 = vpop.xlane.xlu0 %1296
    %v1298 = vsel %vm72, %v1294, 0.0
    %1299 = vadd.xlane.f32.xlu0 %v1298
    %v1300 = vpop.xlane.xlu0 %1299
    %v1301 = vrcp.pop 32.0
    %v1302 = vmul.f32 %v1297, %v1301
    %v1303 = vmul.f32 %v1300, %v1301
    %v1304 = vmul.f32 %v1293, %v1293
    %v1305 = vmul.f32 %v1294, %v1294
    %v1306 = vsel %vm72, %v1304, 0.0
    %1307 = vadd.xlane.f32.xlu0 %v1306
    %v1308 = vpop.xlane.xlu0 %1307
    %v1309 = vsel %vm72, %v1305, 0.0
    %1310 = vadd.xlane.f32.xlu0 %v1309
    %v1311 = vpop.xlane.xlu0 %1310
    %v1312 = vmul.f32 %v1308, %v1301
    %v1313 = vmul.f32 %v1311, %v1301
    %v1314 = vmul.f32 %v1302, %v1302
    %v1315 = vmul.f32 %v1303, %v1303
    %v1316 = vsub.f32 %v1312, %v1314
    %v1317 = vsub.f32 %v1313, %v1315
    %v1318 = vsub.f32 %v1293, %v1302
    %v1319 = vsub.f32 %v1294, %v1303
    %v1320 = vadd.f32 %v1316, 1e-05
    %v1321 = vadd.f32 %v1317, 1e-05
    %v1322 = vrsqrt.pop %v1320
    %v1323 = vrsqrt.pop %v1321
    %v1324 = vmul.f32 %v1318, %v1322
    %v1325 = vmul.f32 %v1319, %v1323
    %v1326 = vlaneseq
    %v1327 = vshrl.u32 %v1326, 7
    %v1328 = vsub.s32 1, %v1327
    %v1329 = vrot.slane %v65, %v1328
    %v1330 = vmul.f32 %v1324, %v1329
    %v1331 = vmul.f32 %v1325, %v1329
    %v1332 = vlaneseq
    %v1333 = vshrl.u32 %v1332, 7
    %v1334 = vsub.s32 2, %v1333
    %v1335 = vrot.slane %v65, %v1334
    %v1336 = vadd.f32 %v1330, %v1335
    %v1337 = vadd.f32 %v1331, %v1335
    %v1338 = vpack.c.bf16 %v1337, %v1336
    %v1339 = vlaneseq
    %v1340 = vshrl.u32 %v1339, 7
    %v1341 = vsub.s32 4, %v1340
    %v1342 = vrot.slane %v73, %v1341
    %v1347 = vunpack.c.h.b16 %v49
    %v1348 = vunpack.c.l.b16 %v50
    %v1349 = vunpack.c.h.b16 %v51
    %v1350 = vunpack.c.l.b16 %v52
    %v1351 = vunpack.c.h.b16 %v53
    %v1352 = vunpack.c.l.b16 %v54
    %v1353 = vunpack.c.h.b16 %v55
    %v1354 = vunpack.c.l.b16 %v56
    %v1355 = vpack.c.b16 %v1349, %v1347
    %v1356 = vpack.c.b16 %v1350, %v1348
    %v1357 = vpack.c.b16 %v1353, %v1351
    %v1358 = vpack.c.b16 %v1354, %v1352
    %1359 = vrot.lane.b32.xlu0 %v1355, 32
    %v1360 = vpop.permute.xlu0 %1359
    %1361 = vrot.lane.b32.xlu0 %v1356, 32
    %v1362 = vpop.permute.xlu0 %1361
    %1363 = vrot.lane.b32.xlu0 %v1357, 32
    %v1364 = vpop.permute.xlu0 %1363
    %1365 = vrot.lane.b32.xlu0 %v1358, 32
    %v1366 = vpop.permute.xlu0 %1365
    %vm1367 = vcmask 261120
    %v1368 = vsel %vm1367, %v1360, %v1362
    %v1369 = vsel %vm1367, %v1364, %v1366
    %v1373 = vsel %vm72, %v1338, 0
    %1375 = vmatprep.subr.bf16.mxu0 0
    %1376 = vmatpush1.bf16.msra.mxu0 %v1368
    %1377 = vmatprep.subr.bf16.mxu0 0
    %1378 = vmatpush1.bf16.msra.mxu0 %v1369
    %1379 = vmatprep.subr.bf16.mxu0 0
    %1380 = vmatpush1.bf16.msra.mxu0 0
    %1381 = vmatprep.subr.bf16.mxu0 0
    %1382 = vmatpush1.bf16.msra.mxu0 0
    %1383 = vmatprep.subr.bf16.mxu0 0
    %1384 = vmatpush1.bf16.msra.mxu0 0
    %1385 = vmatprep.subr.bf16.mxu0 0
    %1386 = vmatpush1.bf16.msra.mxu0 0
    %1387 = vmatprep.subr.bf16.mxu0 0
    %1388 = vmatpush1.bf16.msra.mxu0 0
    %1389 = vmatprep.subr.bf16.mxu0 0
    %1390 = vmatpush1.bf16.msra.mxu0 0
    %1391 = vmatprep.subr.bf16.mxu0 0
    %1392 = vmatpush1.bf16.msra.mxu0 0
    %1393 = vmatprep.subr.bf16.mxu0 0
    %1394 = vmatpush1.bf16.msra.mxu0 0
    %1395 = vmatprep.subr.bf16.mxu0 0
    %1396 = vmatpush1.bf16.msra.mxu0 0
    %1397 = vmatprep.subr.bf16.mxu0 0
    %1398 = vmatpush1.bf16.msra.mxu0 0
    %1399 = vmatprep.subr.bf16.mxu0 0
    %1400 = vmatpush1.bf16.msra.mxu0 0
    %1401 = vmatprep.subr.bf16.mxu0 0
    %1402 = vmatpush1.bf16.msra.mxu0 0
    %1403 = vmatprep.subr.bf16.mxu0 0
    %1404 = vmatpush1.bf16.msra.mxu0 0
    %1405 = vmatprep.subr.bf16.mxu0 0
    %1406 = vmatpush1.bf16.msra.mxu0 0
    %1407 = vmatprep.mubr.bf16.mxu0 0
    %1408 = vmatmul.mubr.bf16.gmra.mrb[0].mxu0 %v1373
    %v1409 = vpop.f32.mrb[0].mxu0
    %v1410 = vadd.f32 %v1342, %v1409
    %v1411 = vpop.f32.mrb[0].mxu0
    %v1412 = vpop.f32.mrb[0].mxu0
    %v1413 = vadd.f32 %v1342, %v1412
    %v1414 = vpop.f32.mrb[0].mxu0
    %1415 = vdwg.mxu0
    %v1416 = vmax.f32 %v1410, 0.0
    %v1417 = vmax.f32 %v1413, 0.0
    %v1418 = vpack.c.bf16 %v1417, %v1416
    %v1419 = vlaneseq
    %v1420 = vshrl.u32 %v1419, 7
    %v1421 = vsub.s32 3, %v1420
    %v1422 = vrot.slane %v65, %v1421
    %v1431 = vunpack.c.l.b16 %v57
    %v1432 = vunpack.c.l.b16 %v58
    %v1433 = vunpack.c.l.b16 %v59
    %v1434 = vunpack.c.l.b16 %v60
    %v1435 = vunpack.c.l.b16 %v61
    %v1436 = vunpack.c.l.b16 %v62
    %v1437 = vunpack.c.l.b16 %v63
    %v1438 = vunpack.c.l.b16 %v64
    %v1439 = vpack.c.b16 %v1432, %v1431
    %v1440 = vpack.c.b16 %v1434, %v1433
    %v1441 = vpack.c.b16 %v1436, %v1435
    %v1442 = vpack.c.b16 %v1438, %v1437
    %vm1447 = vcmask 523264
    %v1449 = vsel %vm1447, %v1418, 0
    %1451 = vmatprep.subr.bf16.mxu0 0
    %1452 = vmatpush1.bf16.msra.mxu0 %v1439
    %1453 = vmatprep.subr.bf16.mxu0 0
    %1454 = vmatpush1.bf16.msra.mxu0 %v1440
    %1455 = vmatprep.subr.bf16.mxu0 0
    %1456 = vmatpush1.bf16.msra.mxu0 %v1441
    %1457 = vmatprep.subr.bf16.mxu0 0
    %1458 = vmatpush1.bf16.msra.mxu0 %v1442
    %1459 = vmatprep.subr.bf16.mxu0 0
    %1460 = vmatpush1.bf16.msra.mxu0 0
    %1461 = vmatprep.subr.bf16.mxu0 0
    %1462 = vmatpush1.bf16.msra.mxu0 0
    %1463 = vmatprep.subr.bf16.mxu0 0
    %1464 = vmatpush1.bf16.msra.mxu0 0
    %1465 = vmatprep.subr.bf16.mxu0 0
    %1466 = vmatpush1.bf16.msra.mxu0 0
    %1467 = vmatprep.subr.bf16.mxu0 0
    %1468 = vmatpush1.bf16.msra.mxu0 0
    %1469 = vmatprep.subr.bf16.mxu0 0
    %1470 = vmatpush1.bf16.msra.mxu0 0
    %1471 = vmatprep.subr.bf16.mxu0 0
    %1472 = vmatpush1.bf16.msra.mxu0 0
    %1473 = vmatprep.subr.bf16.mxu0 0
    %1474 = vmatpush1.bf16.msra.mxu0 0
    %1475 = vmatprep.subr.bf16.mxu0 0
    %1476 = vmatpush1.bf16.msra.mxu0 0
    %1477 = vmatprep.subr.bf16.mxu0 0
    %1478 = vmatpush1.bf16.msra.mxu0 0
    %1479 = vmatprep.subr.bf16.mxu0 0
    %1480 = vmatpush1.bf16.msra.mxu0 0
    %1481 = vmatprep.subr.bf16.mxu0 0
    %1482 = vmatpush1.bf16.msra.mxu0 0
    %1483 = vmatprep.mubr.bf16.mxu0 0
    %1484 = vmatmul.mubr.bf16.gmra.mrb[0].mxu0 %v1449
    %v1485 = vpop.f32.mrb[0].mxu0
    %v1486 = vadd.f32 %v1422, %v1485
    %v1487 = vpop.f32.mrb[0].mxu0
    %v1488 = vpop.f32.mrb[0].mxu0
    %v1489 = vadd.f32 %v1422, %v1488
    %v1490 = vpop.f32.mrb[0].mxu0
    %1491 = vdwg.mxu0
    %v1492 = vadd.f32 %v1336, %v1486
    %v1493 = vadd.f32 %v1337, %v1489
    %v1494 = vsel %vm72, %v1492, 0.0
    %1495 = vadd.xlane.f32.xlu0 %v1494
    %v1496 = vpop.xlane.xlu0 %1495
    %v1497 = vsel %vm72, %v1493, 0.0
    %1498 = vadd.xlane.f32.xlu0 %v1497
    %v1499 = vpop.xlane.xlu0 %1498
    %v1500 = vmul.f32 %v1496, %v1301
    %v1501 = vmul.f32 %v1499, %v1301
    %v1502 = vmul.f32 %v1492, %v1492
    %v1503 = vmul.f32 %v1493, %v1493
    %v1504 = vsel %vm72, %v1502, 0.0
    %1505 = vadd.xlane.f32.xlu0 %v1504
    %v1506 = vpop.xlane.xlu0 %1505
    %v1507 = vsel %vm72, %v1503, 0.0
    %1508 = vadd.xlane.f32.xlu0 %v1507
    %v1509 = vpop.xlane.xlu0 %1508
    %v1510 = vmul.f32 %v1506, %v1301
    %v1511 = vmul.f32 %v1509, %v1301
    %v1512 = vmul.f32 %v1500, %v1500
    %v1513 = vmul.f32 %v1501, %v1501
    %v1514 = vsub.f32 %v1510, %v1512
    %v1515 = vsub.f32 %v1511, %v1513
    %v1516 = vsub.f32 %v1492, %v1500
    %v1517 = vsub.f32 %v1493, %v1501
    %v1518 = vadd.f32 %v1514, 1e-05
    %v1519 = vadd.f32 %v1515, 1e-05
    %v1520 = vrsqrt.pop %v1518
    %v1521 = vrsqrt.pop %v1519
    %v1522 = vmul.f32 %v1516, %v1520
    %v1523 = vmul.f32 %v1517, %v1521
    %v1524 = vlaneseq
    %v1525 = vshrl.u32 %v1524, 7
    %v1526 = vsub.s32 4, %v1525
    %v1527 = vrot.slane %v65, %v1526
    %v1528 = vmul.f32 %v1522, %v1527
    %v1529 = vmul.f32 %v1523, %v1527
    %v1530 = vlaneseq
    %v1531 = vshrl.u32 %v1530, 7
    %v1532 = vsub.s32 5, %v1531
    %v1533 = vrot.slane %v65, %v1532
    %v1534 = vadd.f32 %v1528, %v1533
    %v1535 = vadd.f32 %v1529, %v1533
    %v1536 = vpack.c.bf16 %v1535, %v1534
    %v1537 = vlaneseq
    %v1538 = vshrl.u32 %v1537, 7
    %v1539 = vsub.s32 6, %v1538
    %v1540 = vrot.slane %v65, %v1539
    %v1544 = vsel %vm72, %v1536, 0
    %1546 = vmatprep.subr.bf16.mxu0 0
    %1547 = vmatpush1.bf16.msra.mxu0 %v1355
    %1548 = vmatprep.subr.bf16.mxu0 0
    %1549 = vmatpush1.bf16.msra.mxu0 %v1357
    %1550 = vmatprep.subr.bf16.mxu0 0
    %1551 = vmatpush1.bf16.msra.mxu0 0
    %1552 = vmatprep.subr.bf16.mxu0 0
    %1553 = vmatpush1.bf16.msra.mxu0 0
    %1554 = vmatprep.subr.bf16.mxu0 0
    %1555 = vmatpush1.bf16.msra.mxu0 0
    %1556 = vmatprep.subr.bf16.mxu0 0
    %1557 = vmatpush1.bf16.msra.mxu0 0
    %1558 = vmatprep.subr.bf16.mxu0 0
    %1559 = vmatpush1.bf16.msra.mxu0 0
    %1560 = vmatprep.subr.bf16.mxu0 0
    %1561 = vmatpush1.bf16.msra.mxu0 0
    %1562 = vmatprep.subr.bf16.mxu0 0
    %1563 = vmatpush1.bf16.msra.mxu0 0
    %1564 = vmatprep.subr.bf16.mxu0 0
    %1565 = vmatpush1.bf16.msra.mxu0 0
    %1566 = vmatprep.subr.bf16.mxu0 0
    %1567 = vmatpush1.bf16.msra.mxu0 0
    %1568 = vmatprep.subr.bf16.mxu0 0
    %1569 = vmatpush1.bf16.msra.mxu0 0
    %1570 = vmatprep.subr.bf16.mxu0 0
    %1571 = vmatpush1.bf16.msra.mxu0 0
    %1572 = vmatprep.subr.bf16.mxu0 0
    %1573 = vmatpush1.bf16.msra.mxu0 0
    %1574 = vmatprep.subr.bf16.mxu0 0
    %1575 = vmatpush1.bf16.msra.mxu0 0
    %1576 = vmatprep.subr.bf16.mxu0 0
    %1577 = vmatpush1.bf16.msra.mxu0 0
    %1578 = vmatprep.mubr.bf16.mxu0 0
    %1579 = vmatmul.mubr.bf16.gmra.mrb[0].mxu0 %v1544
    %v1580 = vpop.f32.mrb[0].mxu0
    %v1581 = vadd.f32 %v1540, %v1580
    %v1582 = vpop.f32.mrb[0].mxu0
    %v1583 = vpop.f32.mrb[0].mxu0
    %v1584 = vadd.f32 %v1540, %v1583
    %v1585 = vpop.f32.mrb[0].mxu0
    %1586 = vdwg.mxu0
    %vm1587 = vcmp.gt.f32.partialorder %v1581, 0.0
    %vm1588 = vcmp.gt.f32.partialorder %v1584, 0.0
    %v1589 = vmin.f32 %v1581, 0.0
    %v1590 = vmin.f32 %v1584, 0.0
    %v1591 = vmul.f32 %v1589, 1.442695
    %v1592 = vpow.pop %v1591
    %v1593 = vmul.f32 %v1590, 1.442695
    %v1594 = vpow.pop %v1593
    %v1595 = vsub.f32 %v1592, 1.0
    %v1596 = vsub.f32 %v1594, 1.0
    %v1597 = vsel %vm1587, %v1581, %v1595
    %v1598 = vsel %vm1588, %v1584, %v1596
    %v1599 = vpack.c.bf16 %v1598, %v1597
    %v1600 = vlaneseq
    %v1601 = vshrl.u32 %v1600, 7
    %v1602 = vsub.s32 7, %v1601
    %v1603 = vrot.slane %v65, %v1602
    %1604 = vrot.lane.b32.xlu0 %v1355, 96
    %v1605 = vpop.permute.xlu0 %1604
    %1606 = vrot.lane.b32.xlu0 %v1357, 96
    %v1607 = vpop.permute.xlu0 %1606
    %v1611 = vsel %vm72, %v1599, 0
    %1613 = vmatprep.subr.bf16.mxu0 0
    %1614 = vmatpush1.bf16.msra.mxu0 %v1605
    %1615 = vmatprep.subr.bf16.mxu0 0
    %1616 = vmatpush1.bf16.msra.mxu0 %v1607
    %1617 = vmatprep.subr.bf16.mxu0 0
    %1618 = vmatpush1.bf16.msra.mxu0 0
    %1619 = vmatprep.subr.bf16.mxu0 0
    %1620 = vmatpush1.bf16.msra.mxu0 0
    %1621 = vmatprep.subr.bf16.mxu0 0
    %1622 = vmatpush1.bf16.msra.mxu0 0
    %1623 = vmatprep.subr.bf16.mxu0 0
    %1624 = vmatpush1.bf16.msra.mxu0 0
    %1625 = vmatprep.subr.bf16.mxu0 0
    %1626 = vmatpush1.bf16.msra.mxu0 0
    %1627 = vmatprep.subr.bf16.mxu0 0
    %1628 = vmatpush1.bf16.msra.mxu0 0
    %1629 = vmatprep.subr.bf16.mxu0 0
    %1630 = vmatpush1.bf16.msra.mxu0 0
    %1631 = vmatprep.subr.bf16.mxu0 0
    %1632 = vmatpush1.bf16.msra.mxu0 0
    %1633 = vmatprep.subr.bf16.mxu0 0
    %1634 = vmatpush1.bf16.msra.mxu0 0
    %1635 = vmatprep.subr.bf16.mxu0 0
    %1636 = vmatpush1.bf16.msra.mxu0 0
    %1637 = vmatprep.subr.bf16.mxu0 0
    %1638 = vmatpush1.bf16.msra.mxu0 0
    %1639 = vmatprep.subr.bf16.mxu0 0
    %1640 = vmatpush1.bf16.msra.mxu0 0
    %1641 = vmatprep.subr.bf16.mxu0 0
    %1642 = vmatpush1.bf16.msra.mxu0 0
    %1643 = vmatprep.subr.bf16.mxu0 0
    %1644 = vmatpush1.bf16.msra.mxu0 0
    %1645 = vmatprep.mubr.bf16.mxu0 0
    %1646 = vmatmul.mubr.bf16.gmra.mrb[0].mxu0 %v1611
    %v1647 = vpop.f32.mrb[0].mxu0
    %v1648 = vadd.f32 %v1603, %v1647
    %v1649 = vpop.f32.mrb[0].mxu0
    %v1650 = vpop.f32.mrb[0].mxu0
    %v1651 = vadd.f32 %v1603, %v1650
    %v1652 = vpop.f32.mrb[0].mxu0
    %1653 = vdwg.mxu0
    %v1654 = vpack.c.bf16 %v1651, %v1648
    %v1655 = vlaneseq
    %v1656 = vshrl.u32 %v1655, 7
    %v1657 = vsub.s32 0, %v1656
    %v1658 = vrot.slane %v66, %v1657
    %1659 = vrot.lane.b32.xlu0 %v1355, 64
    %v1660 = vpop.permute.xlu0 %1659
    %1661 = vrot.lane.b32.xlu0 %v1357, 64
    %v1662 = vpop.permute.xlu0 %1661
    %v1666 = vsel %vm72, %v1654, 0
    %1668 = vmatprep.subr.bf16.mxu0 0
    %1669 = vmatpush1.bf16.msra.mxu0 %v1660
    %1670 = vmatprep.subr.bf16.mxu0 0
    %1671 = vmatpush1.bf16.msra.mxu0 %v1662
    %1672 = vmatprep.subr.bf16.mxu0 0
    %1673 = vmatpush1.bf16.msra.mxu0 0
    %1674 = vmatprep.subr.bf16.mxu0 0
    %1675 = vmatpush1.bf16.msra.mxu0 0
    %1676 = vmatprep.subr.bf16.mxu0 0
    %1677 = vmatpush1.bf16.msra.mxu0 0
    %1678 = vmatprep.subr.bf16.mxu0 0
    %1679 = vmatpush1.bf16.msra.mxu0 0
    %1680 = vmatprep.subr.bf16.mxu0 0
    %1681 = vmatpush1.bf16.msra.mxu0 0
    %1682 = vmatprep.subr.bf16.mxu0 0
    %1683 = vmatpush1.bf16.msra.mxu0 0
    %1684 = vmatprep.subr.bf16.mxu0 0
    %1685 = vmatpush1.bf16.msra.mxu0 0
    %1686 = vmatprep.subr.bf16.mxu0 0
    %1687 = vmatpush1.bf16.msra.mxu0 0
    %1688 = vmatprep.subr.bf16.mxu0 0
    %1689 = vmatpush1.bf16.msra.mxu0 0
    %1690 = vmatprep.subr.bf16.mxu0 0
    %1691 = vmatpush1.bf16.msra.mxu0 0
    %1692 = vmatprep.subr.bf16.mxu0 0
    %1693 = vmatpush1.bf16.msra.mxu0 0
    %1694 = vmatprep.subr.bf16.mxu0 0
    %1695 = vmatpush1.bf16.msra.mxu0 0
    %1696 = vmatprep.subr.bf16.mxu0 0
    %1697 = vmatpush1.bf16.msra.mxu0 0
    %1698 = vmatprep.subr.bf16.mxu0 0
    %1699 = vmatpush1.bf16.msra.mxu0 0
    %1700 = vmatprep.mubr.bf16.mxu0 0
    %1701 = vmatmul.mubr.bf16.gmra.mrb[0].mxu0 %v1666
    %v1702 = vpop.f32.mrb[0].mxu0
    %v1703 = vadd.f32 %v1658, %v1702
    %v1704 = vpop.f32.mrb[0].mxu0
    %v1705 = vpop.f32.mrb[0].mxu0
    %v1706 = vadd.f32 %v1658, %v1705
    %v1707 = vpop.f32.mrb[0].mxu0
    %1708 = vdwg.mxu0
    %v1709 = vxor.u32 %v1703, 2147483648
    %v1710 = vxor.u32 %v1706, 2147483648
    %v1711 = vmul.f32 %v1709, 1.442695
    %v1712 = vpow.pop %v1711
    %v1713 = vmul.f32 %v1710, 1.442695
    %v1714 = vpow.pop %v1713
    %v1715 = vadd.f32 %v1712, 1.0
    %v1716 = vadd.f32 %v1714, 1.0
    %v1717 = vrcp.pop %v1715
    %v1718 = vmul.f32 1.0, %v1717
    %v1719 = vrcp.pop %v1716
    %v1720 = vmul.f32 1.0, %v1719
    %v1721 = vmul.f32 %v1648, %v1718
    %v1722 = vmul.f32 %v1651, %v1720
    %v1723 = vsub.f32 1.0, %v1718
    %v1724 = vsub.f32 1.0, %v1720
    %v1725 = vmul.f32 %v1723, %v1534
    %v1726 = vmul.f32 %v1724, %v1535
    %v1727 = vadd.f32 %v1721, %v1725
    %v1728 = vadd.f32 %v1722, %v1726
    %1729 = vst.msk [vmem:[#allocation7] sm:$0xff] %vm72, %v1727
    %1730 = vst.msk [vmem:[#allocation7 + $0x8] sm:$0xff] %vm72, %v1728
    // Predicated region
    $region26: #{tpu_custom_call.1} parent=1 // pred_check
      _
    $region27: #{tpu_custom_call.1} parent=1 // pred_check_branch
      %1732 = sbr.rel (0) target = $region29
    $region28: #{tpu_custom_call.1} parent=1 // pred_region
      %s1734 = ssub.s32 256, 256
      %1735 = vsyncadd [#allocation4], %s1734
      %s1736 = sshll.u32 [#allocation7], 4
      %s1737 = int_to_ptr.vmem [resolvable:$true] %s1736
      %1742 = dma.vmem_to_hbm [thread:$0]  %s1737, 256, %s4, [#allocation4], 128, 128, 8
    $region29: #{tpu_custom_call.1} parent=1 // pred_fallthru
      _
    // Predicated region
    $region30: #{tpu_custom_call.1} parent=1 // pred_check
      _
    $region31: #{tpu_custom_call.1} parent=1 // pred_check_branch
      %1744 = sbr.rel (0) target = $region33
    $region32: #{tpu_custom_call.1} parent=1 // pred_region
      %1745 = dma.done [#allocation4], 256
    $region33: #{tpu_custom_call.1} parent=1 // pred_fallthru
      _
    %1746 = vsyncpa [#allocation3], 1
    %1747 = vsyncpa [#allocation6], 1
    %1748 = vsyncpa [#allocation4], 1

</llo_original>
